<compile_context>
chip_gen: v6e
topology: v6e:2x2x1
jax: 0.10.0
libtpu: 0.0.40
codegen_flags: <defaults>
</compile_context>

<pallas_src>
import math
from functools import partial

import jax
import jax.numpy as jnp
from jax.experimental import pallas as pl
from jax.experimental.pallas import tpu as pltpu


def _round_up(x, m):
    return ((x + m - 1) // m) * m


def _physical_vmem_bytes():
    """Physical per-core VMEM; conservative fallback = 64 MiB (v7x)."""
    phys = 64 * 1024 * 1024
    try:
        info = pltpu.get_tpu_info()
        cap = int(getattr(info, "vmem_capacity_bytes", 0) or 0)
        if cap > 0:
            phys = cap
    except Exception:
        pass
    return phys


def _pick_tile_e(E, Np, Rp, fp_total, budget_bytes):
    """Largest edge tile (multiple of 256 for the 256-wide MXU, >=128) that keeps the
    double-buffered int8 one-hot tiles plus f32 temporaries under `budget_bytes`."""
    # E-tile-independent residents: double-buffered bf16 feature slabs + the resident
    # f32 output block (counted twice, conservatively).
    fixed = 2 * (Np + Rp) * fp_total * 2 + 2 * Np * fp_total * 4
    # Per edge row: double-buffered int8 one-hot tiles (src/rel gathers + dst scatter)
    # + ~6 f32-equivalent (tE, fp_total) temporaries (h_src, r_gat, msg, bf16 copies).
    per_edge = 2 * (2 * Np + Rp) + 6 * fp_total * 4
    raw = max(budget_bytes - fixed, 0) // per_edge
    if raw >= 256:
        t_e = min((raw // 256) * 256, 4096)
    else:
        t_e = 128
    return min(t_e, _round_up(E, 128))


def _gat_kernel(h_ref, r_ref, gsrc_ref, grel_ref, gdst_ref, o_ref, *,
                n_head, fp_h, f):
    # h_ref    : (Np, n_head*fp_h) bf16  lane-packed per-head node features;
    #            per head block: lanes [0:f]=features, [f]=h_i@a0, [f+1]=1.0 marker.
    # r_ref    : (Rp, n_head*fp_h) bf16  lane-packed relation features;
    #            per head block: lanes [0:f]=features, [f]=r@a1, [f+1]=0.
    # gsrc_ref : (tE, Np) int8  one-hot gather tile for A[2] (src node)
    # grel_ref : (tE, Rp) int8  one-hot gather tile for A[1] (relation)
    # gdst_ref : (tE, Np) int8  one-hot (edge-major) scatter tile for A[0] (dst node)
    # o_ref    : (Np, n_head*fp_h) f32  resident accumulator / output
    k = pl.program_id(0)

    @pl.when(k == 0)
    def _():
        o_ref[...] = jnp.zeros_like(o_ref)

    # int8 -> bf16 after the DMA (HBM bytes stay halved); MXU matmuls in bf16 with
    # f32 accumulation.  One matmul covers every head (lane-packed feature slab).
    gsrc = gsrc_ref[...].astype(jnp.bfloat16)                                  # (tE, Np)
    grel = grel_ref[...].astype(jnp.bfloat16)                                  # (tE, Rp)

    h_src = jnp.dot(gsrc, h_ref[...], preferred_element_type=jnp.float32)     # (tE, Fpt)
    r_gat = jnp.dot(grel, r_ref[...], preferred_element_type=jnp.float32)     # (tE, Fpt)

    # Per-head message (h[src] - r[rel]) * edge_e.  The marker lane (value 1 in h,
    # 0 in r) makes the same scatter matmul also produce the rowsum normaliser.
    msg_parts = []
    for i in range(n_head):
        c0 = i * fp_h
        score = h_src[:, c0 + f:c0 + f + 1] + r_gat[:, c0 + f:c0 + f + 1]      # (tE, 1)
        # edge_e = exp(-leaky_relu(score, negative_slope=0.2))
        edge_e = jnp.exp(-jnp.where(score >= 0, score, 0.2 * score))           # (tE, 1)
        diff = h_src[:, c0:c0 + fp_h] - r_gat[:, c0:c0 + fp_h]                 # (tE, fp_h)
        msg_parts.append(diff * edge_e)
    msg = jnp.concatenate(msg_parts, axis=1).astype(jnp.bfloat16)              # (tE, Fpt)

    # Scatter-add onto dst nodes: contract over the edge dimension (dim 0 of both),
    # so the gdst edge-tile DMA is contiguous in HBM.
    gdst = gdst_ref[...].astype(jnp.bfloat16)                                  # (tE, Np)
    o_ref[...] += jax.lax.dot_general(
        gdst, msg, (((0,), (0,)), ((), ())),
        preferred_element_type=jnp.float32)                                    # (Np, Fpt)

    @pl.when(k == pl.num_programs(0) - 1)
    def _():
        acc = o_ref[...]
        outs = []
        for i in range(n_head):
            c0 = i * fp_h
            blk = acc[:, c0:c0 + fp_h]
            rowsum = blk[:, f + 1:f + 2]
            # Guard zero rows (padded nodes / nodes with no incoming edge); the
            # PyTorch reference would produce NaN/Inf there — we return 0 instead.
            denom = jnp.where(rowsum > 0.0, rowsum, 1.0)
            outs.append(blk / denom)
        o_ref[...] = jnp.concatenate(outs, axis=1)


def r_multihead_graph_attention_2m(h, inputr, A, w, a_src_dst,
                                   *, vmem_budget_bytes=None):
    """Pallas implementation of RMultiHeadGraphAttention2m.forward (diag=True, no bias)."""
    N, F = h.shape
    R = inputr.shape[0]
    E = A.shape[1]
    n_head = a_src_dst.shape[0]

    fp_h = _round_up(F + 2, 128)        # +2 aux lanes: [F]=score, [F+1]=rowsum marker
    fp_total = n_head * fp_h            # heads packed along the lane axis
    Np = _round_up(N, 128)
    Rp = _round_up(R, 128)

    if vmem_budget_bytes is None:
        phys = _physical_vmem_bytes()
        vmem_budget_bytes = int(phys * 0.55)
        vmem_limit_bytes = int(phys * 0.75)
    else:
        vmem_limit_bytes = int(vmem_budget_bytes * 1.5)

    t_e = _pick_tile_e(E, Np, Rp, fp_total, vmem_budget_bytes)
    Ep = _round_up(E, t_e)
    n_e_tiles = Ep // t_e

    dst = A[0].astype(jnp.int32)
    rel = A[1].astype(jnp.int32)
    src = A[2].astype(jnp.int32)

    # ---- glue (plain JAX) --------------------------------------------------------
    # Head i uses h * prod_{j<i} w[j] (the in-place update in the PyTorch code).
    if n_head > 1:
        wcum = jnp.concatenate(
            [jnp.ones((1, F), jnp.float32),
             jnp.cumprod(w.reshape(n_head - 1, F).astype(jnp.float32), axis=0)],
            axis=0)                                                     # (n_head, F)
    else:
        wcum = jnp.ones((1, F), jnp.float32)
    h_heads = h.astype(jnp.float32)[None, :, :] * wcum[:, None, :]       # (n_head, N, F)

    a = a_src_dst.reshape(n_head, 2, F).astype(jnp.float32)
    score_h = jnp.einsum('hnf,hf->hn', h_heads, a[:, 0])                 # (n_head, N)
    score_r = jnp.einsum('rf,hf->hr', inputr.astype(jnp.float32), a[:, 1])  # (n_head, R)

    # Lane-packed, lane-dense feature slabs (head i -> lanes [i*fp_h, (i+1)*fp_h)):
    #   lanes [0:F] features, [F] per-row score, [F+1] constant-1 marker (h only).
    h_blk = jnp.zeros((n_head, Np, fp_h), jnp.float32)
    h_blk = h_blk.at[:, :N, :F].set(h_heads)
    h_blk = h_blk.at[:, :N, F].set(score_h)
    h_blk = h_blk.at[:, :N, F + 1].set(1.0)
    h_aug = h_blk.transpose(1, 0, 2).reshape(Np, fp_total).astype(jnp.bfloat16)

    r_blk = jnp.zeros((n_head, Rp, fp_h), jnp.float32)
    r_blk = r_blk.at[:, :R, :F].set(inputr.astype(jnp.float32))
    r_blk = r_blk.at[:, :R, F].set(score_r)
    r_aug = r_blk.transpose(1, 0, 2).reshape(Rp, fp_total).astype(jnp.bfloat16)

    # One-hot gather/scatter matrices as int8 (cast to bf16 in-kernel); padded edges
    # use index -1 -> all-zero rows, so they contribute nothing to the scatter-add.
    pad_e = Ep - E
    src_p = jnp.concatenate([src, jnp.full((pad_e,), -1, jnp.int32)])
    rel_p = jnp.concatenate([rel, jnp.full((pad_e,), -1, jnp.int32)])
    dst_p = jnp.concatenate([dst, jnp.full((pad_e,), -1, jnp.int32)])
    gsrc = (src_p[:, None] == jnp.arange(Np)[None, :]).astype(jnp.int8)   # (Ep, Np)
    grel = (rel_p[:, None] == jnp.arange(Rp)[None, :]).astype(jnp.int8)   # (Ep, Rp)
    gdst = (dst_p[:, None] == jnp.arange(Np)[None, :]).astype(jnp.int8)   # (Ep, Np)

    flops = 2 * Ep * fp_total * (Np + Rp + Np)
    transcendentals = n_head * Ep
    bytes_accessed = (Ep * (2 * Np + Rp) * 1          # int8 one-hot streams (once!)
                      + (Np + Rp) * fp_total * 2      # bf16 feature slabs
                      + Np * fp_total * 4)            # f32 output

    out = pl.pallas_call(
        partial(_gat_kernel, n_head=n_head, fp_h=fp_h, f=F),
        out_shape=jax.ShapeDtypeStruct((Np, fp_total), jnp.float32),
        grid=(n_e_tiles,),
        in_specs=[
            pl.BlockSpec((Np, fp_total), lambda k: (0, 0)),   # h_aug (all heads)
            pl.BlockSpec((Rp, fp_total), lambda k: (0, 0)),   # r_aug (all heads)
            pl.BlockSpec((t_e, Np), lambda k: (k, 0)),        # gather(src) tile
            pl.BlockSpec((t_e, Rp), lambda k: (k, 0)),        # gather(rel) tile
            pl.BlockSpec((t_e, Np), lambda k: (k, 0)),        # scatter(dst) tile
        ],
        out_specs=pl.BlockSpec((Np, fp_total), lambda k: (0, 0)),
        compiler_params=pltpu.CompilerParams(
            dimension_semantics=("arbitrary",),
            vmem_limit_bytes=vmem_limit_bytes),
        cost_estimate=pl.CostEstimate(flops=flops,
                                      transcendentals=transcendentals,
                                      bytes_accessed=bytes_accessed),
    )(h_aug, r_aug, gsrc, grel, gdst)

    # (Np, n_head*fp_h) -> (n_head, N, F)
    return out.reshape(Np, n_head, fp_h).transpose(1, 0, 2)[:, :N, :F]


def reference(h, inputr, A, w, a_src_dst):
    """Pure-JAX f32 reference mirroring the PyTorch forward (diag=True, eval mode)."""
    dst, rel, src = A[0], A[1], A[2]
    N, F = h.shape
    n_head = a_src_dst.shape[0]
    outs = []
    h_cur = h
    for i in range(n_head):
        if i >= 1:
            h_cur = h_cur * w[i - 1]                       # (1, F) broadcast
        h_src = h_cur[src]                                 # (E, F)
        r_gat = inputr[rel]                                # (E, F)
        score = (h_src @ a_src_dst[i, 0] + r_gat @ a_src_dst[i, 1])[:, 0]   # (E,)
        edge_e = jnp.exp(-jax.nn.leaky_relu(score, negative_slope=0.2))
        rowsum = jax.ops.segment_sum(edge_e, dst, num_segments=N)           # (N,)
        hp = jax.ops.segment_sum((h_src - r_gat) * edge_e[:, None], dst, num_segments=N)
        outs.append(hp / rowsum[:, None])
    return jnp.stack(outs, axis=0)


if __name__ == "__main__":
    n_head = 2
    f_out = 32     # diag=True => f_in == f_out
    N = 16         # number of entity nodes
    R = 8          # number of relations
    E = 48         # number of edges

    key = jax.random.PRNGKey(0)
    k_h, k_r, k_w, k_a, k_dst, k_rel, k_src = jax.random.split(key, 7)

    h = jax.random.normal(k_h, (N, f_out), dtype=jnp.float32)
    inputr = jax.random.normal(k_r, (R, f_out), dtype=jnp.float32)

    # Parameters (synthetic init matching __init__ shapes):
    #   w:         (n_head - 1, 1, f_out)
    #   a_src_dst: (n_head, 2, f_out, 1)   normal(0, 1/sqrt(2*f_out))
    w = 0.5 + 0.1 * jax.random.normal(k_w, (n_head - 1, 1, f_out), dtype=jnp.float32)
    stdv = 1.0 / math.sqrt(2 * f_out)
    a_src_dst = stdv * jax.random.normal(k_a, (n_head, 2, f_out, 1), dtype=jnp.float32)

    # Edge list: first N edges guarantee every node receives at least one edge.
    dst_extra = jax.random.randint(k_dst, (E - N,), 0, N)
    dst = jnp.concatenate([jnp.arange(N, dtype=jnp.int32), dst_extra.astype(jnp.int32)])
    rel = jax.random.randint(k_rel, (E,), 0, R).astype(jnp.int32)
    src = jax.random.randint(k_src, (E,), 0, N).astype(jnp.int32)
    A = jnp.stack([dst, rel, src], axis=0)                 # (3, E)

    out = r_multihead_graph_attention_2m(h, inputr, A, w, a_src_dst)
    out = jax.block_until_ready(out)

    ref = reference(h, inputr, A, w, a_src_dst)
    assert out.shape == (n_head, N, f_out)
    # Looser tolerance: gathered features / messages run through bf16 (f32 MXU accum).
    max_err = jnp.max(jnp.abs(out - ref))
    assert jnp.allclose(out, ref, atol=1e-1, rtol=1e-1), f"max abs err {max_err}"
    print("KERNEL_OK")
</pallas_src>

<mosaic_0001>
module attributes {stable_mosaic.version = 11 : i64} {
  func.func @_gat_kernel(%arg0: i32, %arg1: memref<128x256xbf16, #tpu.memory_space<vmem>>, %arg2: memref<128x256xbf16, #tpu.memory_space<vmem>>, %arg3: memref<128x128xi8, #tpu.memory_space<vmem>>, %arg4: memref<128x128xi8, #tpu.memory_space<vmem>>, %arg5: memref<128x128xi8, #tpu.memory_space<vmem>>, %arg6: memref<128x256xf32, #tpu.memory_space<vmem>>) attributes {dimension_semantics = [#tpu.dimension_semantics<arbitrary>], iteration_bounds = array<i64: 1>, scalar_prefetch = 0 : i64, scratch_operands = 0 : i64, tpu.core_type = #tpu.core_type<tc>, window_params = [{pipeline_mode = #tpu.pipeline_mode<synchronous>, transform_indices = @transform_0, window_bounds = array<i64: 128, 256>}, {pipeline_mode = #tpu.pipeline_mode<synchronous>, transform_indices = @transform_1, window_bounds = array<i64: 128, 256>}, {transform_indices = @transform_2, window_bounds = array<i64: 128, 128>}, {transform_indices = @transform_3, window_bounds = array<i64: 128, 128>}, {transform_indices = @transform_4, window_bounds = array<i64: 128, 128>}, {pipeline_mode = #tpu.pipeline_mode<synchronous>, transform_indices = @transform_5, window_bounds = array<i64: 128, 256>}]} {
    %c0_i32 = arith.constant 0 : i32
    %0 = arith.cmpi eq, %arg0, %c0_i32 : i32
    %1 = arith.extui %0 : i1 to i32
    %c0_i32_0 = arith.constant 0 : i32
    %2 = arith.cmpi ne, %1, %c0_i32_0 : i32
    scf.if %2 {
      %cst_24 = arith.constant 0.000000e+00 : f32
      %54 = vector.broadcast %cst_24 : f32 to vector<128x256xf32>
      %c0_25 = arith.constant 0 : index
      %c0_26 = arith.constant 0 : index
      %55 = vector.load %arg6[%c0_25, %c0_26] : memref<128x256xf32, #tpu.memory_space<vmem>>, vector<128x256xf32>
      tpu.vector_store %arg6[%c0_25, %c0_26], %54 {strides = array<i32>} : memref<128x256xf32, #tpu.memory_space<vmem>>, vector<128x256xf32>,
    } else {
    }
    %c0 = arith.constant 0 : index
    %c0_1 = arith.constant 0 : index
    %3 = vector.load %arg3[%c0, %c0_1] : memref<128x128xi8, #tpu.memory_space<vmem>>, vector<128x128xi8>
    %4 = arith.sitofp %3 : vector<128x128xi8> to vector<128x128xbf16>
    %c0_2 = arith.constant 0 : index
    %c0_3 = arith.constant 0 : index
    %5 = vector.load %arg4[%c0_2, %c0_3] : memref<128x128xi8, #tpu.memory_space<vmem>>, vector<128x128xi8>
    %6 = arith.sitofp %5 : vector<128x128xi8> to vector<128x128xbf16>
    %c0_4 = arith.constant 0 : index
    %c0_5 = arith.constant 0 : index
    %7 = vector.load %arg1[%c0_4, %c0_5] : memref<128x256xbf16, #tpu.memory_space<vmem>>, vector<128x256xbf16>
    %cst = arith.constant dense<0.000000e+00> : vector<128x256xf32>
    %8 = tpu.matmul %4, %7, %cst {dimension_numbers = #tpu.dot_dimension_numbers<[1], [0], [0], [1], [0, 0, 1, 1], [], []>} : vector<128x128xbf16>, vector<128x256xbf16>, vector<128x256xf32> -> vector<128x256xf32>
    %c0_6 = arith.constant 0 : index
    %c0_7 = arith.constant 0 : index
    %9 = vector.load %arg2[%c0_6, %c0_7] : memref<128x256xbf16, #tpu.memory_space<vmem>>, vector<128x256xbf16>
    %cst_8 = arith.constant dense<0.000000e+00> : vector<128x256xf32>
    %10 = tpu.matmul %6, %9, %cst_8 {dimension_numbers = #tpu.dot_dimension_numbers<[1], [0], [0], [1], [0, 0, 1, 1], [], []>} : vector<128x128xbf16>, vector<128x256xbf16>, vector<128x256xf32> -> vector<128x256xf32>
    %11 = vector.extract_strided_slice %8 {offsets = [0, 32], sizes = [128, 1], strides = [1, 1]} : vector<128x256xf32> to vector<128x1xf32>
    %12 = vector.extract_strided_slice %10 {offsets = [0, 32], sizes = [128, 1], strides = [1, 1]} : vector<128x256xf32> to vector<128x1xf32>
    %13 = arith.addf %11, %12 : vector<128x1xf32>
    %cst_9 = arith.constant 0.000000e+00 : f32
    %14 = vector.broadcast %cst_9 : f32 to vector<128x1xf32>
    %15 = arith.cmpf oge, %13, %14 : vector<128x1xf32>
    %cst_10 = arith.constant 2.000000e-01 : f32
    %16 = vector.broadcast %cst_10 : f32 to vector<128x1xf32>
    %17 = arith.mulf %16, %13 : vector<128x1xf32>
    %18 = arith.select %15, %13, %17 : vector<128x1xi1>, vector<128x1xf32>
    %cst_11 = arith.constant 0.000000e+00 : f32
    %19 = vector.broadcast %cst_11 : f32 to vector<128x1xf32>
    %20 = arith.subf %19, %18 : vector<128x1xf32>
    %21 = math.exp %20 : vector<128x1xf32>
    %22 = vector.extract_strided_slice %8 {offsets = [0, 0], sizes = [128, 128], strides = [1, 1]} : vector<128x256xf32> to vector<128x128xf32>
    %23 = vector.extract_strided_slice %10 {offsets = [0, 0], sizes = [128, 128], strides = [1, 1]} : vector<128x256xf32> to vector<128x128xf32>
    %24 = arith.subf %22, %23 : vector<128x128xf32>
    %25 = vector.broadcast %21 : vector<128x1xf32> to vector<128x128xf32>
    %26 = arith.mulf %24, %25 : vector<128x128xf32>
    %27 = vector.extract_strided_slice %8 {offsets = [0, 160], sizes = [128, 1], strides = [1, 1]} : vector<128x256xf32> to vector<128x1xf32>
    %28 = vector.extract_strided_slice %10 {offsets = [0, 160], sizes = [128, 1], strides = [1, 1]} : vector<128x256xf32> to vector<128x1xf32>
    %29 = arith.addf %27, %28 : vector<128x1xf32>
    %cst_12 = arith.constant 0.000000e+00 : f32
    %30 = vector.broadcast %cst_12 : f32 to vector<128x1xf32>
    %31 = arith.cmpf oge, %29, %30 : vector<128x1xf32>
    %cst_13 = arith.constant 2.000000e-01 : f32
    %32 = vector.broadcast %cst_13 : f32 to vector<128x1xf32>
    %33 = arith.mulf %32, %29 : vector<128x1xf32>
    %34 = arith.select %31, %29, %33 : vector<128x1xi1>, vector<128x1xf32>
    %cst_14 = arith.constant 0.000000e+00 : f32
    %35 = vector.broadcast %cst_14 : f32 to vector<128x1xf32>
    %36 = arith.subf %35, %34 : vector<128x1xf32>
    %37 = math.exp %36 : vector<128x1xf32>
    %38 = vector.extract_strided_slice %8 {offsets = [0, 128], sizes = [128, 128], strides = [1, 1]} : vector<128x256xf32> to vector<128x128xf32>
    %39 = vector.extract_strided_slice %10 {offsets = [0, 128], sizes = [128, 128], strides = [1, 1]} : vector<128x256xf32> to vector<128x128xf32>
    %40 = arith.subf %38, %39 : vector<128x128xf32>
    %41 = vector.broadcast %37 : vector<128x1xf32> to vector<128x128xf32>
    %42 = arith.mulf %40, %41 : vector<128x128xf32>
    %43 = tpu.concatenate %26, %42 in 1 : vector<128x128xf32>, vector<128x128xf32> -> vector<128x256xf32>
    %44 = arith.truncf %43 : vector<128x256xf32> to vector<128x256xbf16>
    %c0_15 = arith.constant 0 : index
    %c0_16 = arith.constant 0 : index
    %45 = vector.load %arg5[%c0_15, %c0_16] : memref<128x128xi8, #tpu.memory_space<vmem>>, vector<128x128xi8>
    %46 = arith.sitofp %45 : vector<128x128xi8> to vector<128x128xbf16>
    %c0_17 = arith.constant 0 : index
    %c0_18 = arith.constant 0 : index
    %47 = vector.load %arg6[%c0_17, %c0_18] : memref<128x256xf32, #tpu.memory_space<vmem>>, vector<128x256xf32>
    %cst_19 = arith.constant dense<0.000000e+00> : vector<128x256xf32>
    %48 = tpu.matmul %46, %44, %cst_19 {dimension_numbers = #tpu.dot_dimension_numbers<[0], [0], [1], [1], [0, 1, 1, 1], [], []>} : vector<128x128xbf16>, vector<128x256xbf16>, vector<128x256xf32> -> vector<128x256xf32>
    %49 = arith.addf %47, %48 : vector<128x256xf32>
    %c0_20 = arith.constant 0 : index
    %c0_21 = arith.constant 0 : index
    %50 = vector.load %arg6[%c0_20, %c0_21] : memref<128x256xf32, #tpu.memory_space<vmem>>, vector<128x256xf32>
    tpu.vector_store %arg6[%c0_20, %c0_21], %49 {strides = array<i32>} : memref<128x256xf32, #tpu.memory_space<vmem>>, vector<128x256xf32>,
    %c0_i32_22 = arith.constant 0 : i32
    %51 = arith.cmpi eq, %arg0, %c0_i32_22 : i32
    %52 = arith.extui %51 : i1 to i32
    %c0_i32_23 = arith.constant 0 : i32
    %53 = arith.cmpi ne, %52, %c0_i32_23 : i32
    scf.if %53 {
      %c0_24 = arith.constant 0 : index
      %c0_25 = arith.constant 0 : index
      %54 = vector.load %arg6[%c0_24, %c0_25] : memref<128x256xf32, #tpu.memory_space<vmem>>, vector<128x256xf32>
      %55 = vector.extract_strided_slice %54 {offsets = [0, 0], sizes = [128, 128], strides = [1, 1]} : vector<128x256xf32> to vector<128x128xf32>
      %56 = vector.extract_strided_slice %55 {offsets = [0, 33], sizes = [128, 1], strides = [1, 1]} : vector<128x128xf32> to vector<128x1xf32>
      %cst_26 = arith.constant 0.000000e+00 : f32
      %57 = vector.broadcast %cst_26 : f32 to vector<128x1xf32>
      %58 = arith.cmpf ogt, %56, %57 : vector<128x1xf32>
      %cst_27 = arith.constant 1.000000e+00 : f32
      %59 = vector.broadcast %cst_27 : f32 to vector<128x1xf32>
      %60 = arith.select %58, %56, %59 : vector<128x1xi1>, vector<128x1xf32>
      %61 = vector.broadcast %60 : vector<128x1xf32> to vector<128x128xf32>
      %62 = arith.divf %55, %61 : vector<128x128xf32>
      %63 = vector.extract_strided_slice %54 {offsets = [0, 128], sizes = [128, 128], strides = [1, 1]} : vector<128x256xf32> to vector<128x128xf32>
      %64 = vector.extract_strided_slice %63 {offsets = [0, 33], sizes = [128, 1], strides = [1, 1]} : vector<128x128xf32> to vector<128x1xf32>
      %cst_28 = arith.constant 0.000000e+00 : f32
      %65 = vector.broadcast %cst_28 : f32 to vector<128x1xf32>
      %66 = arith.cmpf ogt, %64, %65 : vector<128x1xf32>
      %cst_29 = arith.constant 1.000000e+00 : f32
      %67 = vector.broadcast %cst_29 : f32 to vector<128x1xf32>
      %68 = arith.select %66, %64, %67 : vector<128x1xi1>, vector<128x1xf32>
      %69 = vector.broadcast %68 : vector<128x1xf32> to vector<128x128xf32>
      %70 = arith.divf %63, %69 : vector<128x128xf32>
      %71 = tpu.concatenate %62, %70 in 1 : vector<128x128xf32>, vector<128x128xf32> -> vector<128x256xf32>
      %c0_30 = arith.constant 0 : index
      %c0_31 = arith.constant 0 : index
      %72 = vector.load %arg6[%c0_30, %c0_31] : memref<128x256xf32, #tpu.memory_space<vmem>>, vector<128x256xf32>
      tpu.vector_store %arg6[%c0_30, %c0_31], %71 {strides = array<i32>} : memref<128x256xf32, #tpu.memory_space<vmem>>, vector<128x256xf32>,
    } else {
    }
    return
  }
  func.func @transform_0(%arg0: i32) -> (i32, i32) {
    %c0_i32 = arith.constant 0 : i32
    %c0_i32_0 = arith.constant 0 : i32
    %c0_i32_1 = arith.constant 0 : i32
    return %c0_i32, %c0_i32_0 : i32, i32
  }
  func.func @transform_1(%arg0: i32) -> (i32, i32) {
    %c0_i32 = arith.constant 0 : i32
    %c0_i32_0 = arith.constant 0 : i32
    %c0_i32_1 = arith.constant 0 : i32
    return %c0_i32, %c0_i32_0 : i32, i32
  }
  func.func @transform_2(%arg0: i32) -> (i32, i32) {
    %c0_i32 = arith.constant 0 : i32
    %c0_i32_0 = arith.constant 0 : i32
    return %arg0, %c0_i32 : i32, i32
  }
  func.func @transform_3(%arg0: i32) -> (i32, i32) {
    %c0_i32 = arith.constant 0 : i32
    %c0_i32_0 = arith.constant 0 : i32
    return %arg0, %c0_i32 : i32, i32
  }
  func.func @transform_4(%arg0: i32) -> (i32, i32) {
    %c0_i32 = arith.constant 0 : i32
    %c0_i32_0 = arith.constant 0 : i32
    return %arg0, %c0_i32 : i32, i32
  }
  func.func @transform_5(%arg0: i32) -> (i32, i32) {
    %c0_i32 = arith.constant 0 : i32
    %c0_i32_0 = arith.constant 0 : i32
    %c0_i32_1 = arith.constant 0 : i32
    return %c0_i32, %c0_i32_0 : i32, i32
  }
}

</mosaic_0001>

<llo_original>
// kernel: tpu_custom_call.1
$region0: #{tpu_custom_call.1}
  #allocation0 [shape = 'u32[]', space=smem, size = 0x4, offset = 0x4, fixed_abs, tag = 'smem constant byte address 0x4 - core index']
  #allocation1 [shape = 'u32[144,128]{1,0:T(1,128)}', space=vmem, size = 0x12000, scoped, tag = 'internal scratch']
  %s0 = inlined_call_operand.hbm [shape: bf16[128,256], index: 0, kind: input, shape index: {}]
  %s1 = inlined_call_operand.hbm [shape: bf16[128,256], index: 1, kind: input, shape index: {}]
  %s2 = inlined_call_operand.hbm [shape: s8[128,128], index: 2, kind: input, shape index: {}]
  %s3 = inlined_call_operand.hbm [shape: s8[128,128], index: 3, kind: input, shape index: {}]
  %s4 = inlined_call_operand.hbm [shape: s8[128,128], index: 4, kind: input, shape index: {}]
  %s5 = inlined_call_operand.hbm [shape: f32[128,256], index: 5, kind: output, shape index: {}]
  %s6 = sld [smem:[#allocation0]]
  $region58: #{tpu_custom_call.1} parent=0
    _
  %s8 = ssub.s32 1, %s6
  %s9 = scalar_select 0, %s8, %s6
  $region1: #{tpu_custom_call.1} parent=0
    #allocation2 [shape = 'u8[65536]{0}', space=vmem, size = 0x10000, scoped, tag = 'input window, operand 0, single buffered']
    #allocation3 [shape = 's32[1]{0}', space=sflag, size = 0x4, scoped, tag = 'scoped memory for tpu_custom_call.1']
    #allocation4 [shape = 's32[1]{0}', space=sflag, size = 0x4, scoped, tag = 'scoped memory for tpu_custom_call.1']
    #allocation5 [shape = 'u8[65536]{0}', space=vmem, size = 0x10000, scoped, tag = 'input window, operand 1, single buffered']
    #allocation6 [shape = 's32[1]{0}', space=sflag, size = 0x4, scoped, tag = 'scoped memory for tpu_custom_call.1']
    #allocation7 [shape = 'u8[16384]{0}', space=vmem, size = 0x4000, scoped, tag = 'input window, operand 2, single buffered']
    #allocation8 [shape = 'u8[16384]{0}', space=vmem, size = 0x4000, scoped, tag = 'input window, operand 3, single buffered']
    #allocation9 [shape = 's32[1]{0}', space=sflag, size = 0x4, scoped, tag = 'scoped memory for tpu_custom_call.1']
    #allocation10 [shape = 'u8[16384]{0}', space=vmem, size = 0x4000, scoped, tag = 'input window, operand 4, single buffered']
    #allocation11 [shape = 'u8[131072]{0}', space=vmem, size = 0x20000, scoped, tag = 'output window, operand 0, single buffered']
    %10 = vsyncpa [#allocation3], 0
    %11 = vsyncpa [#allocation6], 0
    %12 = vsyncpa [#allocation9], 0
    %13 = vsyncpa [#allocation4], 0
    // Predicated region
    $region2: #{tpu_custom_call.1} parent=1 // pred_check
      _
    $region3: #{tpu_custom_call.1} parent=1 // pred_check_branch
      %15 = sbr.rel (0) target = $region5
    $region4: #{tpu_custom_call.1} parent=1 // pred_region
      %s17 = ssub.s32 2048, 2048
      %18 = vsyncadd [#allocation3], %s17
      %s19 = sshll.u32 [#allocation2], 4
      %s20 = int_to_ptr.vmem [resolvable:$true] %s19
      %25 = dma.hbm_to_vmem [thread:$0]  %s0, 2048, %s20, [#allocation3], 128, 128, 8
    $region5: #{tpu_custom_call.1} parent=1 // pred_fallthru
      _
    // Predicated region
    $region6: #{tpu_custom_call.1} parent=1 // pred_check
      _
    $region7: #{tpu_custom_call.1} parent=1 // pred_check_branch
      %27 = sbr.rel (0) target = $region9
    $region8: #{tpu_custom_call.1} parent=1 // pred_region
      %s29 = ssub.s32 2048, 2048
      %30 = vsyncadd [#allocation6], %s29
      %s31 = sshll.u32 [#allocation5], 4
      %s32 = int_to_ptr.vmem [resolvable:$true] %s31
      %37 = dma.hbm_to_vmem [thread:$0]  %s1, 2048, %s32, [#allocation6], 128, 128, 8
    $region9: #{tpu_custom_call.1} parent=1 // pred_fallthru
      _
    // Predicated region
    $region10: #{tpu_custom_call.1} parent=1 // pred_check
      _
    $region11: #{tpu_custom_call.1} parent=1 // pred_check_branch
      %39 = sbr.rel (0) target = $region13
    $region12: #{tpu_custom_call.1} parent=1 // pred_region
      %s41 = ssub.s32 512, 512
      %42 = vsyncadd [#allocation6], %s41
      %s43 = sshll.u32 [#allocation7], 4
      %s44 = int_to_ptr.vmem [resolvable:$true] %s43
      %49 = dma.hbm_to_vmem [thread:$0]  %s2, 512, %s44, [#allocation6], 128, 128, 8
    $region13: #{tpu_custom_call.1} parent=1 // pred_fallthru
      _
    // Predicated region
    $region14: #{tpu_custom_call.1} parent=1 // pred_check
      _
    $region15: #{tpu_custom_call.1} parent=1 // pred_check_branch
      %51 = sbr.rel (0) target = $region17
    $region16: #{tpu_custom_call.1} parent=1 // pred_region
      %s53 = ssub.s32 512, 512
      %54 = vsyncadd [#allocation9], %s53
      %s55 = sshll.u32 [#allocation8], 4
      %s56 = int_to_ptr.vmem [resolvable:$true] %s55
      %61 = dma.hbm_to_vmem [thread:$0]  %s3, 512, %s56, [#allocation9], 128, 128, 8
    $region17: #{tpu_custom_call.1} parent=1 // pred_fallthru
      _
    // Predicated region
    $region18: #{tpu_custom_call.1} parent=1 // pred_check
      _
    $region19: #{tpu_custom_call.1} parent=1 // pred_check_branch
      %63 = sbr.rel (0) target = $region21
    $region20: #{tpu_custom_call.1} parent=1 // pred_region
      %s65 = ssub.s32 512, 512
      %66 = vsyncadd [#allocation9], %s65
      %s67 = sshll.u32 [#allocation10], 4
      %s68 = int_to_ptr.vmem [resolvable:$true] %s67
      %73 = dma.hbm_to_vmem [thread:$0]  %s4, 512, %s68, [#allocation9], 128, 128, 8
    $region21: #{tpu_custom_call.1} parent=1 // pred_fallthru
      _
    // Predicated region
    $region22: #{tpu_custom_call.1} parent=1 // pred_check
      _
    $region23: #{tpu_custom_call.1} parent=1 // pred_check_branch
      %75 = sbr.rel (0) target = $region25
    $region24: #{tpu_custom_call.1} parent=1 // pred_region
      %76 = dma.done [#allocation3], 2048
    $region25: #{tpu_custom_call.1} parent=1 // pred_fallthru
      _
    // Predicated region
    $region26: #{tpu_custom_call.1} parent=1 // pred_check
      _
    $region27: #{tpu_custom_call.1} parent=1 // pred_check_branch
      %78 = sbr.rel (0) target = $region29
    $region28: #{tpu_custom_call.1} parent=1 // pred_region
      %79 = dma.done [#allocation6], 2048
    $region29: #{tpu_custom_call.1} parent=1 // pred_fallthru
      _
    // Predicated region
    $region30: #{tpu_custom_call.1} parent=1 // pred_check
      _
    $region31: #{tpu_custom_call.1} parent=1 // pred_check_branch
      %81 = sbr.rel (0) target = $region33
    $region32: #{tpu_custom_call.1} parent=1 // pred_region
      %82 = dma.done [#allocation6], 512
    $region33: #{tpu_custom_call.1} parent=1 // pred_fallthru
      _
    // Predicated region
    $region34: #{tpu_custom_call.1} parent=1 // pred_check
      _
    $region35: #{tpu_custom_call.1} parent=1 // pred_check_branch
      %84 = sbr.rel (0) target = $region37
    $region36: #{tpu_custom_call.1} parent=1 // pred_region
      %85 = dma.done [#allocation9], 512
    $region37: #{tpu_custom_call.1} parent=1 // pred_fallthru
      _
    // Predicated region
    $region38: #{tpu_custom_call.1} parent=1 // pred_check
      _
    $region39: #{tpu_custom_call.1} parent=1 // pred_check_branch
      %87 = sbr.rel (0) target = $region41
    $region40: #{tpu_custom_call.1} parent=1 // pred_region
      %88 = dma.done [#allocation9], 512
    $region41: #{tpu_custom_call.1} parent=1 // pred_fallthru
      _
    %p90 = scmp.eq.s32.totalorder 0, 0
    // Predicated region
    $region42: #{tpu_custom_call.1} parent=1 // pred_check
      %p91 = pneg %p90
    $region43: #{tpu_custom_call.1} parent=1 // pred_check_branch
      %93 = sbr.rel (%p91) target = $region45
    $region44: #{tpu_custom_call.1} parent=1 // pred_region
      %94 = vst [vmem:[#allocation11] sm:$0xff] 0.0
      %95 = vst [vmem:[#allocation11 + $0x8] sm:$0xff] 0.0
      %96 = vst [vmem:[#allocation11 + $0x10] sm:$0xff] 0.0
      %97 = vst [vmem:[#allocation11 + $0x18] sm:$0xff] 0.0
      %98 = vst [vmem:[#allocation11 + $0x20] sm:$0xff] 0.0
      %99 = vst [vmem:[#allocation11 + $0x28] sm:$0xff] 0.0
      %100 = vst [vmem:[#allocation11 + $0x30] sm:$0xff] 0.0
      %101 = vst [vmem:[#allocation11 + $0x38] sm:$0xff] 0.0
      %102 = vst [vmem:[#allocation11 + $0x40] sm:$0xff] 0.0
      %103 = vst [vmem:[#allocation11 + $0x48] sm:$0xff] 0.0
      %104 = vst [vmem:[#allocation11 + $0x50] sm:$0xff] 0.0
      %105 = vst [vmem:[#allocation11 + $0x58] sm:$0xff] 0.0
      %106 = vst [vmem:[#allocation11 + $0x60] sm:$0xff] 0.0
      %107 = vst [vmem:[#allocation11 + $0x68] sm:$0xff] 0.0
      %108 = vst [vmem:[#allocation11 + $0x70] sm:$0xff] 0.0
      %109 = vst [vmem:[#allocation11 + $0x78] sm:$0xff] 0.0
      %110 = vst [vmem:[#allocation11 + $0x80] sm:$0xff] 0.0
      %111 = vst [vmem:[#allocation11 + $0x88] sm:$0xff] 0.0
      %112 = vst [vmem:[#allocation11 + $0x90] sm:$0xff] 0.0
      %113 = vst [vmem:[#allocation11 + $0x98] sm:$0xff] 0.0
      %114 = vst [vmem:[#allocation11 + $0xa0] sm:$0xff] 0.0
      %115 = vst [vmem:[#allocation11 + $0xa8] sm:$0xff] 0.0
      %116 = vst [vmem:[#allocation11 + $0xb0] sm:$0xff] 0.0
      %117 = vst [vmem:[#allocation11 + $0xb8] sm:$0xff] 0.0
      %118 = vst [vmem:[#allocation11 + $0xc0] sm:$0xff] 0.0
      %119 = vst [vmem:[#allocation11 + $0xc8] sm:$0xff] 0.0
      %120 = vst [vmem:[#allocation11 + $0xd0] sm:$0xff] 0.0
      %121 = vst [vmem:[#allocation11 + $0xd8] sm:$0xff] 0.0
      %122 = vst [vmem:[#allocation11 + $0xe0] sm:$0xff] 0.0
      %123 = vst [vmem:[#allocation11 + $0xe8] sm:$0xff] 0.0
      %124 = vst [vmem:[#allocation11 + $0xf0] sm:$0xff] 0.0
      %125 = vst [vmem:[#allocation11 + $0xf8] sm:$0xff] 0.0
    $region45: #{tpu_custom_call.1} parent=1 // pred_fallthru
      _
    %v126 = vld [vmem:[#allocation7] sm:$0xff]
    %v127 = vld [vmem:[#allocation7 + $0x8] sm:$0xff]
    %v128 = vld [vmem:[#allocation7 + $0x10] sm:$0xff]
    %v129 = vld [vmem:[#allocation7 + $0x18] sm:$0xff]
    %v130 = vunpack.c.l.s8.bf16 %v126
    %v131 = vunpack.c.h.s8.bf16 %v126
    %v132 = vunpack.c.l.s8.bf16 %v127
    %v133 = vunpack.c.h.s8.bf16 %v127
    %v134 = vunpack.c.l.s8.bf16 %v128
    %v135 = vunpack.c.h.s8.bf16 %v128
    %v136 = vunpack.c.l.s8.bf16 %v129
    %v137 = vunpack.c.h.s8.bf16 %v129
    %v138 = vld [vmem:[#allocation8] sm:$0xff]
    %v139 = vld [vmem:[#allocation8 + $0x8] sm:$0xff]
    %v140 = vld [vmem:[#allocation8 + $0x10] sm:$0xff]
    %v141 = vld [vmem:[#allocation8 + $0x18] sm:$0xff]
    %v142 = vunpack.c.l.s8.bf16 %v138
    %v143 = vunpack.c.h.s8.bf16 %v138
    %v144 = vunpack.c.l.s8.bf16 %v139
    %v145 = vunpack.c.h.s8.bf16 %v139
    %v146 = vunpack.c.l.s8.bf16 %v140
    %v147 = vunpack.c.h.s8.bf16 %v140
    %v148 = vunpack.c.l.s8.bf16 %v141
    %v149 = vunpack.c.h.s8.bf16 %v141
    %v150 = vld [vmem:[#allocation2] sm:$0xff]
    %v151 = vld [vmem:[#allocation2 + $0x8] sm:$0xff]
    %v152 = vld [vmem:[#allocation2 + $0x10] sm:$0xff]
    %v153 = vld [vmem:[#allocation2 + $0x18] sm:$0xff]
    %v154 = vld [vmem:[#allocation2 + $0x20] sm:$0xff]
    %v155 = vld [vmem:[#allocation2 + $0x28] sm:$0xff]
    %v156 = vld [vmem:[#allocation2 + $0x30] sm:$0xff]
    %v157 = vld [vmem:[#allocation2 + $0x38] sm:$0xff]
    %v158 = vld [vmem:[#allocation2 + $0x40] sm:$0xff]
    %v159 = vld [vmem:[#allocation2 + $0x48] sm:$0xff]
    %v160 = vld [vmem:[#allocation2 + $0x50] sm:$0xff]
    %v161 = vld [vmem:[#allocation2 + $0x58] sm:$0xff]
    %v162 = vld [vmem:[#allocation2 + $0x60] sm:$0xff]
    %v163 = vld [vmem:[#allocation2 + $0x68] sm:$0xff]
    %v164 = vld [vmem:[#allocation2 + $0x70] sm:$0xff]
    %v165 = vld [vmem:[#allocation2 + $0x78] sm:$0xff]
    %v182 = vunpack.c.l.b16 %v150
    %v183 = vunpack.c.h.b16 %v150
    %v184 = vunpack.c.l.b16 %v151
    %v185 = vunpack.c.h.b16 %v151
    %v186 = vunpack.c.l.b16 %v152
    %v187 = vunpack.c.h.b16 %v152
    %v188 = vunpack.c.l.b16 %v153
    %v189 = vunpack.c.h.b16 %v153
    %v190 = vunpack.c.l.b16 %v154
    %v191 = vunpack.c.h.b16 %v154
    %v192 = vunpack.c.l.b16 %v155
    %v193 = vunpack.c.h.b16 %v155
    %v194 = vunpack.c.l.b16 %v156
    %v195 = vunpack.c.h.b16 %v156
    %v196 = vunpack.c.l.b16 %v157
    %v197 = vunpack.c.h.b16 %v157
    %v198 = vunpack.c.l.b16 %v158
    %v199 = vunpack.c.h.b16 %v158
    %v200 = vunpack.c.l.b16 %v159
    %v201 = vunpack.c.h.b16 %v159
    %v202 = vunpack.c.l.b16 %v160
    %v203 = vunpack.c.h.b16 %v160
    %v204 = vunpack.c.l.b16 %v161
    %v205 = vunpack.c.h.b16 %v161
    %v206 = vunpack.c.l.b16 %v162
    %v207 = vunpack.c.h.b16 %v162
    %v208 = vunpack.c.l.b16 %v163
    %v209 = vunpack.c.h.b16 %v163
    %v210 = vunpack.c.l.b16 %v164
    %v211 = vunpack.c.h.b16 %v164
    %v212 = vunpack.c.l.b16 %v165
    %v213 = vunpack.c.h.b16 %v165
    %v214 = vpack.c.b16 %v184, %v182
    %v215 = vpack.c.b16 %v185, %v183
    %v216 = vpack.c.b16 %v188, %v186
    %v217 = vpack.c.b16 %v189, %v187
    %v218 = vpack.c.b16 %v192, %v190
    %v219 = vpack.c.b16 %v193, %v191
    %v220 = vpack.c.b16 %v196, %v194
    %v221 = vpack.c.b16 %v197, %v195
    %v222 = vpack.c.b16 %v200, %v198
    %v223 = vpack.c.b16 %v201, %v199
    %v224 = vpack.c.b16 %v204, %v202
    %v225 = vpack.c.b16 %v205, %v203
    %v226 = vpack.c.b16 %v208, %v206
    %v227 = vpack.c.b16 %v209, %v207
    %v228 = vpack.c.b16 %v212, %v210
    %v229 = vpack.c.b16 %v213, %v211
    %246 = vmatprep.subr.bf16.mxu0 %v229
    %247 = vmatpush1.bf16.msra.mxu0 %v228
    %248 = vmatprep.subr.bf16.mxu0 %v227
    %249 = vmatpush1.bf16.msra.mxu0 %v226
    %250 = vmatprep.subr.bf16.mxu0 %v225
    %251 = vmatpush1.bf16.msra.mxu0 %v224
    %252 = vmatprep.subr.bf16.mxu0 %v223
    %253 = vmatpush1.bf16.msra.mxu0 %v222
    %254 = vmatprep.subr.bf16.mxu0 %v221
    %255 = vmatpush1.bf16.msra.mxu0 %v220
    %256 = vmatprep.subr.bf16.mxu0 %v219
    %257 = vmatpush1.bf16.msra.mxu0 %v218
    %258 = vmatprep.subr.bf16.mxu0 %v217
    %259 = vmatpush1.bf16.msra.mxu0 %v216
    %260 = vmatprep.subr.bf16.mxu0 %v215
    %261 = vmatpush1.bf16.msra.mxu0 %v214
    %262 = vmatprep.subr.bf16.mxu0 0
    %263 = vmatpush2.bf16.msra.mxu0 0
    %264 = vmatprep.subr.bf16.mxu0 0
    %265 = vmatpush2.bf16.msra.mxu0 0
    %266 = vmatprep.subr.bf16.mxu0 0
    %267 = vmatpush2.bf16.msra.mxu0 0
    %268 = vmatprep.subr.bf16.mxu0 0
    %269 = vmatpush2.bf16.msra.mxu0 0
    %270 = vmatprep.subr.bf16.mxu0 0
    %271 = vmatpush2.bf16.msra.mxu0 0
    %272 = vmatprep.subr.bf16.mxu0 0
    %273 = vmatpush2.bf16.msra.mxu0 0
    %274 = vmatprep.subr.bf16.mxu0 0
    %275 = vmatpush2.bf16.msra.mxu0 0
    %276 = vmatprep.subr.bf16.mxu0 0
    %277 = vmatpush2.bf16.msra.mxu0 0
    %278 = vmatprep.mubr.bf16.mxu0 0
    %279 = vmatmul.mubr.bf16.gmra.mxu0 %v130
    %v280 = vpop.f32.mrf.mxu0
    %v281 = vadd.f32 0.0, %v280
    %v282 = vpop.f32.mrf.mxu0
    %v283 = vadd.f32 0.0, %v282
    %v284 = vpop.f32.mrf.mxu0
    %v285 = vadd.f32 0.0, %v284
    %v286 = vpop.f32.mrf.mxu0
    %v287 = vadd.f32 0.0, %v286
    %288 = vmatprep.mubr.bf16.mxu0 0
    %289 = vmatmul.mubr.bf16.gmra.mxu0 %v131
    %v290 = vpop.f32.mrf.mxu0
    %v291 = vadd.f32 0.0, %v290
    %v292 = vpop.f32.mrf.mxu0
    %v293 = vadd.f32 0.0, %v292
    %v294 = vpop.f32.mrf.mxu0
    %v295 = vadd.f32 0.0, %v294
    %v296 = vpop.f32.mrf.mxu0
    %v297 = vadd.f32 0.0, %v296
    %298 = vmatprep.mubr.bf16.mxu0 0
    %299 = vmatmul.mubr.bf16.gmra.mxu0 %v132
    %v300 = vpop.f32.mrf.mxu0
    %v301 = vadd.f32 0.0, %v300
    %v302 = vpop.f32.mrf.mxu0
    %v303 = vadd.f32 0.0, %v302
    %v304 = vpop.f32.mrf.mxu0
    %v305 = vadd.f32 0.0, %v304
    %v306 = vpop.f32.mrf.mxu0
    %v307 = vadd.f32 0.0, %v306
    %308 = vmatprep.mubr.bf16.mxu0 0
    %309 = vmatmul.mubr.bf16.gmra.mxu0 %v133
    %v310 = vpop.f32.mrf.mxu0
    %v311 = vadd.f32 0.0, %v310
    %v312 = vpop.f32.mrf.mxu0
    %v313 = vadd.f32 0.0, %v312
    %v314 = vpop.f32.mrf.mxu0
    %v315 = vadd.f32 0.0, %v314
    %v316 = vpop.f32.mrf.mxu0
    %v317 = vadd.f32 0.0, %v316
    %318 = vmatprep.mubr.bf16.mxu0 0
    %319 = vmatmul.mubr.bf16.gmra.mxu0 %v134
    %v320 = vpop.f32.mrf.mxu0
    %v321 = vadd.f32 0.0, %v320
    %v322 = vpop.f32.mrf.mxu0
    %v323 = vadd.f32 0.0, %v322
    %v324 = vpop.f32.mrf.mxu0
    %v325 = vadd.f32 0.0, %v324
    %v326 = vpop.f32.mrf.mxu0
    %v327 = vadd.f32 0.0, %v326
    %328 = vmatprep.mubr.bf16.mxu0 0
    %329 = vmatmul.mubr.bf16.gmra.mxu0 %v135
    %v330 = vpop.f32.mrf.mxu0
    %v331 = vadd.f32 0.0, %v330
    %v332 = vpop.f32.mrf.mxu0
    %v333 = vadd.f32 0.0, %v332
    %v334 = vpop.f32.mrf.mxu0
    %v335 = vadd.f32 0.0, %v334
    %v336 = vpop.f32.mrf.mxu0
    %v337 = vadd.f32 0.0, %v336
    %338 = vmatprep.mubr.bf16.mxu0 0
    %339 = vmatmul.mubr.bf16.gmra.mxu0 %v136
    %v340 = vpop.f32.mrf.mxu0
    %v341 = vadd.f32 0.0, %v340
    %v342 = vpop.f32.mrf.mxu0
    %v343 = vadd.f32 0.0, %v342
    %v344 = vpop.f32.mrf.mxu0
    %v345 = vadd.f32 0.0, %v344
    %v346 = vpop.f32.mrf.mxu0
    %v347 = vadd.f32 0.0, %v346
    %348 = vmatprep.mubr.bf16.mxu0 0
    %349 = vmatmul.mubr.bf16.gmra.mxu0 %v137
    %v350 = vpop.f32.mrf.mxu0
    %v351 = vadd.f32 0.0, %v350
    %v352 = vpop.f32.mrf.mxu0
    %v353 = vadd.f32 0.0, %v352
    %v354 = vpop.f32.mrf.mxu0
    %v355 = vadd.f32 0.0, %v354
    %v356 = vpop.f32.mrf.mxu0
    %v357 = vadd.f32 0.0, %v356
    %358 = vdwg.mxu0
    %v359 = vld [vmem:[#allocation5] sm:$0xff]
    %v360 = vld [vmem:[#allocation5 + $0x8] sm:$0xff]
    %v361 = vld [vmem:[#allocation5 + $0x10] sm:$0xff]
    %v362 = vld [vmem:[#allocation5 + $0x18] sm:$0xff]
    %v363 = vld [vmem:[#allocation5 + $0x20] sm:$0xff]
    %v364 = vld [vmem:[#allocation5 + $0x28] sm:$0xff]
    %v365 = vld [vmem:[#allocation5 + $0x30] sm:$0xff]
    %v366 = vld [vmem:[#allocation5 + $0x38] sm:$0xff]
    %v367 = vld [vmem:[#allocation5 + $0x40] sm:$0xff]
    %v368 = vld [vmem:[#allocation5 + $0x48] sm:$0xff]
    %v369 = vld [vmem:[#allocation5 + $0x50] sm:$0xff]
    %v370 = vld [vmem:[#allocation5 + $0x58] sm:$0xff]
    %v371 = vld [vmem:[#allocation5 + $0x60] sm:$0xff]
    %v372 = vld [vmem:[#allocation5 + $0x68] sm:$0xff]
    %v373 = vld [vmem:[#allocation5 + $0x70] sm:$0xff]
    %v374 = vld [vmem:[#allocation5 + $0x78] sm:$0xff]
    %v391 = vunpack.c.l.b16 %v359
    %v392 = vunpack.c.h.b16 %v359
    %v393 = vunpack.c.l.b16 %v360
    %v394 = vunpack.c.h.b16 %v360
    %v395 = vunpack.c.l.b16 %v361
    %v396 = vunpack.c.h.b16 %v361
    %v397 = vunpack.c.l.b16 %v362
    %v398 = vunpack.c.h.b16 %v362
    %v399 = vunpack.c.l.b16 %v363
    %v400 = vunpack.c.h.b16 %v363
    %v401 = vunpack.c.l.b16 %v364
    %v402 = vunpack.c.h.b16 %v364
    %v403 = vunpack.c.l.b16 %v365
    %v404 = vunpack.c.h.b16 %v365
    %v405 = vunpack.c.l.b16 %v366
    %v406 = vunpack.c.h.b16 %v366
    %v407 = vunpack.c.l.b16 %v367
    %v408 = vunpack.c.h.b16 %v367
    %v409 = vunpack.c.l.b16 %v368
    %v410 = vunpack.c.h.b16 %v368
    %v411 = vunpack.c.l.b16 %v369
    %v412 = vunpack.c.h.b16 %v369
    %v413 = vunpack.c.l.b16 %v370
    %v414 = vunpack.c.h.b16 %v370
    %v415 = vunpack.c.l.b16 %v371
    %v416 = vunpack.c.h.b16 %v371
    %v417 = vunpack.c.l.b16 %v372
    %v418 = vunpack.c.h.b16 %v372
    %v419 = vunpack.c.l.b16 %v373
    %v420 = vunpack.c.h.b16 %v373
    %v421 = vunpack.c.l.b16 %v374
    %v422 = vunpack.c.h.b16 %v374
    %v423 = vpack.c.b16 %v393, %v391
    %v424 = vpack.c.b16 %v394, %v392
    %v425 = vpack.c.b16 %v397, %v395
    %v426 = vpack.c.b16 %v398, %v396
    %v427 = vpack.c.b16 %v401, %v399
    %v428 = vpack.c.b16 %v402, %v400
    %v429 = vpack.c.b16 %v405, %v403
    %v430 = vpack.c.b16 %v406, %v404
    %v431 = vpack.c.b16 %v409, %v407
    %v432 = vpack.c.b16 %v410, %v408
    %v433 = vpack.c.b16 %v413, %v411
    %v434 = vpack.c.b16 %v414, %v412
    %v435 = vpack.c.b16 %v417, %v415
    %v436 = vpack.c.b16 %v418, %v416
    %v437 = vpack.c.b16 %v421, %v419
    %v438 = vpack.c.b16 %v422, %v420
    %455 = vmatprep.subr.bf16.mxu0 %v438
    %456 = vmatpush1.bf16.msra.mxu0 %v437
    %457 = vmatprep.subr.bf16.mxu0 %v436
    %458 = vmatpush1.bf16.msra.mxu0 %v435
    %459 = vmatprep.subr.bf16.mxu0 %v434
    %460 = vmatpush1.bf16.msra.mxu0 %v433
    %461 = vmatprep.subr.bf16.mxu0 %v432
    %462 = vmatpush1.bf16.msra.mxu0 %v431
    %463 = vmatprep.subr.bf16.mxu0 %v430
    %464 = vmatpush1.bf16.msra.mxu0 %v429
    %465 = vmatprep.subr.bf16.mxu0 %v428
    %466 = vmatpush1.bf16.msra.mxu0 %v427
    %467 = vmatprep.subr.bf16.mxu0 %v426
    %468 = vmatpush1.bf16.msra.mxu0 %v425
    %469 = vmatprep.subr.bf16.mxu0 %v424
    %470 = vmatpush1.bf16.msra.mxu0 %v423
    %471 = vmatprep.subr.bf16.mxu0 0
    %472 = vmatpush2.bf16.msra.mxu0 0
    %473 = vmatprep.subr.bf16.mxu0 0
    %474 = vmatpush2.bf16.msra.mxu0 0
    %475 = vmatprep.subr.bf16.mxu0 0
    %476 = vmatpush2.bf16.msra.mxu0 0
    %477 = vmatprep.subr.bf16.mxu0 0
    %478 = vmatpush2.bf16.msra.mxu0 0
    %479 = vmatprep.subr.bf16.mxu0 0
    %480 = vmatpush2.bf16.msra.mxu0 0
    %481 = vmatprep.subr.bf16.mxu0 0
    %482 = vmatpush2.bf16.msra.mxu0 0
    %483 = vmatprep.subr.bf16.mxu0 0
    %484 = vmatpush2.bf16.msra.mxu0 0
    %485 = vmatprep.subr.bf16.mxu0 0
    %486 = vmatpush2.bf16.msra.mxu0 0
    %487 = vmatprep.mubr.bf16.mxu0 0
    %488 = vmatmul.mubr.bf16.gmra.mxu0 %v142
    %v489 = vpop.f32.mrf.mxu0
    %v490 = vadd.f32 0.0, %v489
    %v491 = vpop.f32.mrf.mxu0
    %v492 = vadd.f32 0.0, %v491
    %v493 = vpop.f32.mrf.mxu0
    %v494 = vadd.f32 0.0, %v493
    %v495 = vpop.f32.mrf.mxu0
    %v496 = vadd.f32 0.0, %v495
    %497 = vmatprep.mubr.bf16.mxu0 0
    %498 = vmatmul.mubr.bf16.gmra.mxu0 %v143
    %v499 = vpop.f32.mrf.mxu0
    %v500 = vadd.f32 0.0, %v499
    %v501 = vpop.f32.mrf.mxu0
    %v502 = vadd.f32 0.0, %v501
    %v503 = vpop.f32.mrf.mxu0
    %v504 = vadd.f32 0.0, %v503
    %v505 = vpop.f32.mrf.mxu0
    %v506 = vadd.f32 0.0, %v505
    %507 = vmatprep.mubr.bf16.mxu0 0
    %508 = vmatmul.mubr.bf16.gmra.mxu0 %v144
    %v509 = vpop.f32.mrf.mxu0
    %v510 = vadd.f32 0.0, %v509
    %v511 = vpop.f32.mrf.mxu0
    %v512 = vadd.f32 0.0, %v511
    %v513 = vpop.f32.mrf.mxu0
    %v514 = vadd.f32 0.0, %v513
    %v515 = vpop.f32.mrf.mxu0
    %v516 = vadd.f32 0.0, %v515
    %517 = vmatprep.mubr.bf16.mxu0 0
    %518 = vmatmul.mubr.bf16.gmra.mxu0 %v145
    %v519 = vpop.f32.mrf.mxu0
    %v520 = vadd.f32 0.0, %v519
    %v521 = vpop.f32.mrf.mxu0
    %v522 = vadd.f32 0.0, %v521
    %v523 = vpop.f32.mrf.mxu0
    %v524 = vadd.f32 0.0, %v523
    %v525 = vpop.f32.mrf.mxu0
    %v526 = vadd.f32 0.0, %v525
    %527 = vmatprep.mubr.bf16.mxu0 0
    %528 = vmatmul.mubr.bf16.gmra.mxu0 %v146
    %v529 = vpop.f32.mrf.mxu0
    %v530 = vadd.f32 0.0, %v529
    %v531 = vpop.f32.mrf.mxu0
    %v532 = vadd.f32 0.0, %v531
    %v533 = vpop.f32.mrf.mxu0
    %v534 = vadd.f32 0.0, %v533
    %v535 = vpop.f32.mrf.mxu0
    %v536 = vadd.f32 0.0, %v535
    %537 = vmatprep.mubr.bf16.mxu0 0
    %538 = vmatmul.mubr.bf16.gmra.mxu0 %v147
    %v539 = vpop.f32.mrf.mxu0
    %v540 = vadd.f32 0.0, %v539
    %v541 = vpop.f32.mrf.mxu0
    %v542 = vadd.f32 0.0, %v541
    %v543 = vpop.f32.mrf.mxu0
    %v544 = vadd.f32 0.0, %v543
    %v545 = vpop.f32.mrf.mxu0
    %v546 = vadd.f32 0.0, %v545
    %547 = vmatprep.mubr.bf16.mxu0 0
    %548 = vmatmul.mubr.bf16.gmra.mxu0 %v148
    %v549 = vpop.f32.mrf.mxu0
    %v550 = vadd.f32 0.0, %v549
    %v551 = vpop.f32.mrf.mxu0
    %v552 = vadd.f32 0.0, %v551
    %v553 = vpop.f32.mrf.mxu0
    %v554 = vadd.f32 0.0, %v553
    %v555 = vpop.f32.mrf.mxu0
    %v556 = vadd.f32 0.0, %v555
    %557 = vmatprep.mubr.bf16.mxu0 0
    %558 = vmatmul.mubr.bf16.gmra.mxu0 %v149
    %v559 = vpop.f32.mrf.mxu0
    %v560 = vadd.f32 0.0, %v559
    %v561 = vpop.f32.mrf.mxu0
    %v562 = vadd.f32 0.0, %v561
    %v563 = vpop.f32.mrf.mxu0
    %v564 = vadd.f32 0.0, %v563
    %v565 = vpop.f32.mrf.mxu0
    %v566 = vadd.f32 0.0, %v565
    %567 = vdwg.mxu0
    %v568 = vadd.f32 %v281, %v490
    %v569 = vadd.f32 %v285, %v494
    %v570 = vadd.f32 %v291, %v500
    %v571 = vadd.f32 %v295, %v504
    %v572 = vadd.f32 %v301, %v510
    %v573 = vadd.f32 %v305, %v514
    %v574 = vadd.f32 %v311, %v520
    %v575 = vadd.f32 %v315, %v524
    %v576 = vadd.f32 %v321, %v530
    %v577 = vadd.f32 %v325, %v534
    %v578 = vadd.f32 %v331, %v540
    %v579 = vadd.f32 %v335, %v544
    %v580 = vadd.f32 %v341, %v550
    %v581 = vadd.f32 %v345, %v554
    %v582 = vadd.f32 %v351, %v560
    %v583 = vadd.f32 %v355, %v564
    %vm584 = vcmp.ge.f32.partialorder %v568, 0.0
    %vm585 = vcmp.ge.f32.partialorder %v569, 0.0
    %vm586 = vcmp.ge.f32.partialorder %v570, 0.0
    %vm587 = vcmp.ge.f32.partialorder %v571, 0.0
    %vm588 = vcmp.ge.f32.partialorder %v572, 0.0
    %vm589 = vcmp.ge.f32.partialorder %v573, 0.0
    %vm590 = vcmp.ge.f32.partialorder %v574, 0.0
    %vm591 = vcmp.ge.f32.partialorder %v575, 0.0
    %vm592 = vcmp.ge.f32.partialorder %v576, 0.0
    %vm593 = vcmp.ge.f32.partialorder %v577, 0.0
    %vm594 = vcmp.ge.f32.partialorder %v578, 0.0
    %vm595 = vcmp.ge.f32.partialorder %v579, 0.0
    %vm596 = vcmp.ge.f32.partialorder %v580, 0.0
    %vm597 = vcmp.ge.f32.partialorder %v581, 0.0
    %vm598 = vcmp.ge.f32.partialorder %v582, 0.0
    %vm599 = vcmp.ge.f32.partialorder %v583, 0.0
    %v600 = vmul.f32 %v568, 0.2
    %v601 = vmul.f32 %v569, 0.2
    %v602 = vmul.f32 %v570, 0.2
    %v603 = vmul.f32 %v571, 0.2
    %v604 = vmul.f32 %v572, 0.2
    %v605 = vmul.f32 %v573, 0.2
    %v606 = vmul.f32 %v574, 0.2
    %v607 = vmul.f32 %v575, 0.2
    %v608 = vmul.f32 %v576, 0.2
    %v609 = vmul.f32 %v577, 0.2
    %v610 = vmul.f32 %v578, 0.2
    %v611 = vmul.f32 %v579, 0.2
    %v612 = vmul.f32 %v580, 0.2
    %v613 = vmul.f32 %v581, 0.2
    %v614 = vmul.f32 %v582, 0.2
    %v615 = vmul.f32 %v583, 0.2
    %v616 = vsel %vm584, %v568, %v600
    %v617 = vsel %vm585, %v569, %v601
    %v618 = vsel %vm586, %v570, %v602
    %v619 = vsel %vm587, %v571, %v603
    %v620 = vsel %vm588, %v572, %v604
    %v621 = vsel %vm589, %v573, %v605
    %v622 = vsel %vm590, %v574, %v606
    %v623 = vsel %vm591, %v575, %v607
    %v624 = vsel %vm592, %v576, %v608
    %v625 = vsel %vm593, %v577, %v609
    %v626 = vsel %vm594, %v578, %v610
    %v627 = vsel %vm595, %v579, %v611
    %v628 = vsel %vm596, %v580, %v612
    %v629 = vsel %vm597, %v581, %v613
    %v630 = vsel %vm598, %v582, %v614
    %v631 = vsel %vm599, %v583, %v615
    %v632 = vsub.f32 0.0, %v616
    %v633 = vsub.f32 0.0, %v617
    %v634 = vsub.f32 0.0, %v618
    %v635 = vsub.f32 0.0, %v619
    %v636 = vsub.f32 0.0, %v620
    %v637 = vsub.f32 0.0, %v621
    %v638 = vsub.f32 0.0, %v622
    %v639 = vsub.f32 0.0, %v623
    %v640 = vsub.f32 0.0, %v624
    %v641 = vsub.f32 0.0, %v625
    %v642 = vsub.f32 0.0, %v626
    %v643 = vsub.f32 0.0, %v627
    %v644 = vsub.f32 0.0, %v628
    %v645 = vsub.f32 0.0, %v629
    %v646 = vsub.f32 0.0, %v630
    %v647 = vsub.f32 0.0, %v631
    %v648 = vmul.f32 %v632, 1.442695
    %v649 = vpow.pop %v648
    %v650 = vmul.f32 %v633, 1.442695
    %v651 = vpow.pop %v650
    %v652 = vmul.f32 %v634, 1.442695
    %v653 = vpow.pop %v652
    %v654 = vmul.f32 %v635, 1.442695
    %v655 = vpow.pop %v654
    %v656 = vmul.f32 %v636, 1.442695
    %v657 = vpow.pop %v656
    %v658 = vmul.f32 %v637, 1.442695
    %v659 = vpow.pop %v658
    %v660 = vmul.f32 %v638, 1.442695
    %v661 = vpow.pop %v660
    %v662 = vmul.f32 %v639, 1.442695
    %v663 = vpow.pop %v662
    %v664 = vmul.f32 %v640, 1.442695
    %v665 = vpow.pop %v664
    %v666 = vmul.f32 %v641, 1.442695
    %v667 = vpow.pop %v666
    %v668 = vmul.f32 %v642, 1.442695
    %v669 = vpow.pop %v668
    %v670 = vmul.f32 %v643, 1.442695
    %v671 = vpow.pop %v670
    %v672 = vmul.f32 %v644, 1.442695
    %v673 = vpow.pop %v672
    %v674 = vmul.f32 %v645, 1.442695
    %v675 = vpow.pop %v674
    %v676 = vmul.f32 %v646, 1.442695
    %v677 = vpow.pop %v676
    %v678 = vmul.f32 %v647, 1.442695
    %v679 = vpow.pop %v678
    %v680 = vsub.f32 %v281, %v490
    %v681 = vsub.f32 %v285, %v494
    %v682 = vsub.f32 %v291, %v500
    %v683 = vsub.f32 %v295, %v504
    %v684 = vsub.f32 %v301, %v510
    %v685 = vsub.f32 %v305, %v514
    %v686 = vsub.f32 %v311, %v520
    %v687 = vsub.f32 %v315, %v524
    %v688 = vsub.f32 %v321, %v530
    %v689 = vsub.f32 %v325, %v534
    %v690 = vsub.f32 %v331, %v540
    %v691 = vsub.f32 %v335, %v544
    %v692 = vsub.f32 %v341, %v550
    %v693 = vsub.f32 %v345, %v554
    %v694 = vsub.f32 %v351, %v560
    %v695 = vsub.f32 %v355, %v564
    %697 = vset.pattern.permute.xlu0 32
    %698 = vperm.xlu0 %697, %v649
    %v699 = vpop.permute.xlu0 %698
    %702 = vset.pattern.permute.xlu0 32
    %703 = vperm.xlu0 %702, %v651
    %v704 = vpop.permute.xlu0 %703
    %707 = vset.pattern.permute.xlu0 32
    %708 = vperm.xlu0 %707, %v653
    %v709 = vpop.permute.xlu0 %708
    %712 = vset.pattern.permute.xlu0 32
    %713 = vperm.xlu0 %712, %v655
    %v714 = vpop.permute.xlu0 %713
    %717 = vset.pattern.permute.xlu0 32
    %718 = vperm.xlu0 %717, %v657
    %v719 = vpop.permute.xlu0 %718
    %722 = vset.pattern.permute.xlu0 32
    %723 = vperm.xlu0 %722, %v659
    %v724 = vpop.permute.xlu0 %723
    %727 = vset.pattern.permute.xlu0 32
    %728 = vperm.xlu0 %727, %v661
    %v729 = vpop.permute.xlu0 %728
    %732 = vset.pattern.permute.xlu0 32
    %733 = vperm.xlu0 %732, %v663
    %v734 = vpop.permute.xlu0 %733
    %737 = vset.pattern.permute.xlu0 32
    %738 = vperm.xlu0 %737, %v665
    %v739 = vpop.permute.xlu0 %738
    %742 = vset.pattern.permute.xlu0 32
    %743 = vperm.xlu0 %742, %v667
    %v744 = vpop.permute.xlu0 %743
    %747 = vset.pattern.permute.xlu0 32
    %748 = vperm.xlu0 %747, %v669
    %v749 = vpop.permute.xlu0 %748
    %752 = vset.pattern.permute.xlu0 32
    %753 = vperm.xlu0 %752, %v671
    %v754 = vpop.permute.xlu0 %753
    %757 = vset.pattern.permute.xlu0 32
    %758 = vperm.xlu0 %757, %v673
    %v759 = vpop.permute.xlu0 %758
    %762 = vset.pattern.permute.xlu0 32
    %763 = vperm.xlu0 %762, %v675
    %v764 = vpop.permute.xlu0 %763
    %767 = vset.pattern.permute.xlu0 32
    %768 = vperm.xlu0 %767, %v677
    %v769 = vpop.permute.xlu0 %768
    %772 = vset.pattern.permute.xlu0 32
    %773 = vperm.xlu0 %772, %v679
    %v774 = vpop.permute.xlu0 %773
    %v776 = vmul.f32 %v680, %v699
    %v777 = vmul.f32 %v681, %v704
    %v778 = vmul.f32 %v682, %v709
    %v779 = vmul.f32 %v683, %v714
    %v780 = vmul.f32 %v684, %v719
    %v781 = vmul.f32 %v685, %v724
    %v782 = vmul.f32 %v686, %v729
    %v783 = vmul.f32 %v687, %v734
    %v784 = vmul.f32 %v688, %v739
    %v785 = vmul.f32 %v689, %v744
    %v786 = vmul.f32 %v690, %v749
    %v787 = vmul.f32 %v691, %v754
    %v788 = vmul.f32 %v692, %v759
    %v789 = vmul.f32 %v693, %v764
    %v790 = vmul.f32 %v694, %v769
    %v791 = vmul.f32 %v695, %v774
    %v792 = vadd.f32 %v283, %v492
    %v793 = vadd.f32 %v287, %v496
    %v794 = vadd.f32 %v293, %v502
    %v795 = vadd.f32 %v297, %v506
    %v796 = vadd.f32 %v303, %v512
    %v797 = vadd.f32 %v307, %v516
    %v798 = vadd.f32 %v313, %v522
    %v799 = vadd.f32 %v317, %v526
    %v800 = vadd.f32 %v323, %v532
    %v801 = vadd.f32 %v327, %v536
    %v802 = vadd.f32 %v333, %v542
    %v803 = vadd.f32 %v337, %v546
    %v804 = vadd.f32 %v343, %v552
    %v805 = vadd.f32 %v347, %v556
    %v806 = vadd.f32 %v353, %v562
    %v807 = vadd.f32 %v357, %v566
    %vm808 = vcmp.ge.f32.partialorder %v792, 0.0
    %vm809 = vcmp.ge.f32.partialorder %v793, 0.0
    %vm810 = vcmp.ge.f32.partialorder %v794, 0.0
    %vm811 = vcmp.ge.f32.partialorder %v795, 0.0
    %vm812 = vcmp.ge.f32.partialorder %v796, 0.0
    %vm813 = vcmp.ge.f32.partialorder %v797, 0.0
    %vm814 = vcmp.ge.f32.partialorder %v798, 0.0
    %vm815 = vcmp.ge.f32.partialorder %v799, 0.0
    %vm816 = vcmp.ge.f32.partialorder %v800, 0.0
    %vm817 = vcmp.ge.f32.partialorder %v801, 0.0
    %vm818 = vcmp.ge.f32.partialorder %v802, 0.0
    %vm819 = vcmp.ge.f32.partialorder %v803, 0.0
    %vm820 = vcmp.ge.f32.partialorder %v804, 0.0
    %vm821 = vcmp.ge.f32.partialorder %v805, 0.0
    %vm822 = vcmp.ge.f32.partialorder %v806, 0.0
    %vm823 = vcmp.ge.f32.partialorder %v807, 0.0
    %v824 = vmul.f32 %v792, 0.2
    %v825 = vmul.f32 %v793, 0.2
    %v826 = vmul.f32 %v794, 0.2
    %v827 = vmul.f32 %v795, 0.2
    %v828 = vmul.f32 %v796, 0.2
    %v829 = vmul.f32 %v797, 0.2
    %v830 = vmul.f32 %v798, 0.2
    %v831 = vmul.f32 %v799, 0.2
    %v832 = vmul.f32 %v800, 0.2
    %v833 = vmul.f32 %v801, 0.2
    %v834 = vmul.f32 %v802, 0.2
    %v835 = vmul.f32 %v803, 0.2
    %v836 = vmul.f32 %v804, 0.2
    %v837 = vmul.f32 %v805, 0.2
    %v838 = vmul.f32 %v806, 0.2
    %v839 = vmul.f32 %v807, 0.2
    %v840 = vsel %vm808, %v792, %v824
    %v841 = vsel %vm809, %v793, %v825
    %v842 = vsel %vm810, %v794, %v826
    %v843 = vsel %vm811, %v795, %v827
    %v844 = vsel %vm812, %v796, %v828
    %v845 = vsel %vm813, %v797, %v829
    %v846 = vsel %vm814, %v798, %v830
    %v847 = vsel %vm815, %v799, %v831
    %v848 = vsel %vm816, %v800, %v832
    %v849 = vsel %vm817, %v801, %v833
    %v850 = vsel %vm818, %v802, %v834
    %v851 = vsel %vm819, %v803, %v835
    %v852 = vsel %vm820, %v804, %v836
    %v853 = vsel %vm821, %v805, %v837
    %v854 = vsel %vm822, %v806, %v838
    %v855 = vsel %vm823, %v807, %v839
    %v856 = vsub.f32 0.0, %v840
    %v857 = vsub.f32 0.0, %v841
    %v858 = vsub.f32 0.0, %v842
    %v859 = vsub.f32 0.0, %v843
    %v860 = vsub.f32 0.0, %v844
    %v861 = vsub.f32 0.0, %v845
    %v862 = vsub.f32 0.0, %v846
    %v863 = vsub.f32 0.0, %v847
    %v864 = vsub.f32 0.0, %v848
    %v865 = vsub.f32 0.0, %v849
    %v866 = vsub.f32 0.0, %v850
    %v867 = vsub.f32 0.0, %v851
    %v868 = vsub.f32 0.0, %v852
    %v869 = vsub.f32 0.0, %v853
    %v870 = vsub.f32 0.0, %v854
    %v871 = vsub.f32 0.0, %v855
    %v872 = vmul.f32 %v856, 1.442695
    %v873 = vpow.pop %v872
    %v874 = vmul.f32 %v857, 1.442695
    %v875 = vpow.pop %v874
    %v876 = vmul.f32 %v858, 1.442695
    %v877 = vpow.pop %v876
    %v878 = vmul.f32 %v859, 1.442695
    %v879 = vpow.pop %v878
    %v880 = vmul.f32 %v860, 1.442695
    %v881 = vpow.pop %v880
    %v882 = vmul.f32 %v861, 1.442695
    %v883 = vpow.pop %v882
    %v884 = vmul.f32 %v862, 1.442695
    %v885 = vpow.pop %v884
    %v886 = vmul.f32 %v863, 1.442695
    %v887 = vpow.pop %v886
    %v888 = vmul.f32 %v864, 1.442695
    %v889 = vpow.pop %v888
    %v890 = vmul.f32 %v865, 1.442695
    %v891 = vpow.pop %v890
    %v892 = vmul.f32 %v866, 1.442695
    %v893 = vpow.pop %v892
    %v894 = vmul.f32 %v867, 1.442695
    %v895 = vpow.pop %v894
    %v896 = vmul.f32 %v868, 1.442695
    %v897 = vpow.pop %v896
    %v898 = vmul.f32 %v869, 1.442695
    %v899 = vpow.pop %v898
    %v900 = vmul.f32 %v870, 1.442695
    %v901 = vpow.pop %v900
    %v902 = vmul.f32 %v871, 1.442695
    %v903 = vpow.pop %v902
    %v904 = vsub.f32 %v283, %v492
    %v905 = vsub.f32 %v287, %v496
    %v906 = vsub.f32 %v293, %v502
    %v907 = vsub.f32 %v297, %v506
    %v908 = vsub.f32 %v303, %v512
    %v909 = vsub.f32 %v307, %v516
    %v910 = vsub.f32 %v313, %v522
    %v911 = vsub.f32 %v317, %v526
    %v912 = vsub.f32 %v323, %v532
    %v913 = vsub.f32 %v327, %v536
    %v914 = vsub.f32 %v333, %v542
    %v915 = vsub.f32 %v337, %v546
    %v916 = vsub.f32 %v343, %v552
    %v917 = vsub.f32 %v347, %v556
    %v918 = vsub.f32 %v353, %v562
    %v919 = vsub.f32 %v357, %v566
    %921 = vset.pattern.permute.xlu0 32
    %922 = vperm.xlu0 %921, %v873
    %v923 = vpop.permute.xlu0 %922
    %926 = vset.pattern.permute.xlu0 32
    %927 = vperm.xlu0 %926, %v875
    %v928 = vpop.permute.xlu0 %927
    %931 = vset.pattern.permute.xlu0 32
    %932 = vperm.xlu0 %931, %v877
    %v933 = vpop.permute.xlu0 %932
    %936 = vset.pattern.permute.xlu0 32
    %937 = vperm.xlu0 %936, %v879
    %v938 = vpop.permute.xlu0 %937
    %941 = vset.pattern.permute.xlu0 32
    %942 = vperm.xlu0 %941, %v881
    %v943 = vpop.permute.xlu0 %942
    %946 = vset.pattern.permute.xlu0 32
    %947 = vperm.xlu0 %946, %v883
    %v948 = vpop.permute.xlu0 %947
    %951 = vset.pattern.permute.xlu0 32
    %952 = vperm.xlu0 %951, %v885
    %v953 = vpop.permute.xlu0 %952
    %956 = vset.pattern.permute.xlu0 32
    %957 = vperm.xlu0 %956, %v887
    %v958 = vpop.permute.xlu0 %957
    %961 = vset.pattern.permute.xlu0 32
    %962 = vperm.xlu0 %961, %v889
    %v963 = vpop.permute.xlu0 %962
    %966 = vset.pattern.permute.xlu0 32
    %967 = vperm.xlu0 %966, %v891
    %v968 = vpop.permute.xlu0 %967
    %971 = vset.pattern.permute.xlu0 32
    %972 = vperm.xlu0 %971, %v893
    %v973 = vpop.permute.xlu0 %972
    %976 = vset.pattern.permute.xlu0 32
    %977 = vperm.xlu0 %976, %v895
    %v978 = vpop.permute.xlu0 %977
    %981 = vset.pattern.permute.xlu0 32
    %982 = vperm.xlu0 %981, %v897
    %v983 = vpop.permute.xlu0 %982
    %986 = vset.pattern.permute.xlu0 32
    %987 = vperm.xlu0 %986, %v899
    %v988 = vpop.permute.xlu0 %987
    %991 = vset.pattern.permute.xlu0 32
    %992 = vperm.xlu0 %991, %v901
    %v993 = vpop.permute.xlu0 %992
    %996 = vset.pattern.permute.xlu0 32
    %997 = vperm.xlu0 %996, %v903
    %v998 = vpop.permute.xlu0 %997
    %v1000 = vmul.f32 %v904, %v923
    %v1001 = vmul.f32 %v905, %v928
    %v1002 = vmul.f32 %v906, %v933
    %v1003 = vmul.f32 %v907, %v938
    %v1004 = vmul.f32 %v908, %v943
    %v1005 = vmul.f32 %v909, %v948
    %v1006 = vmul.f32 %v910, %v953
    %v1007 = vmul.f32 %v911, %v958
    %v1008 = vmul.f32 %v912, %v963
    %v1009 = vmul.f32 %v913, %v968
    %v1010 = vmul.f32 %v914, %v973
    %v1011 = vmul.f32 %v915, %v978
    %v1012 = vmul.f32 %v916, %v983
    %v1013 = vmul.f32 %v917, %v988
    %v1014 = vmul.f32 %v918, %v993
    %v1015 = vmul.f32 %v919, %v998
    %v1016 = vpack.c.bf16 %v777, %v776
    %v1017 = vpack.c.bf16 %v1001, %v1000
    %v1018 = vpack.c.bf16 %v779, %v778
    %v1019 = vpack.c.bf16 %v1003, %v1002
    %v1020 = vpack.c.bf16 %v781, %v780
    %v1021 = vpack.c.bf16 %v1005, %v1004
    %v1022 = vpack.c.bf16 %v783, %v782
    %v1023 = vpack.c.bf16 %v1007, %v1006
    %v1024 = vpack.c.bf16 %v785, %v784
    %v1025 = vpack.c.bf16 %v1009, %v1008
    %v1026 = vpack.c.bf16 %v787, %v786
    %v1027 = vpack.c.bf16 %v1011, %v1010
    %v1028 = vpack.c.bf16 %v789, %v788
    %v1029 = vpack.c.bf16 %v1013, %v1012
    %v1030 = vpack.c.bf16 %v791, %v790
    %v1031 = vpack.c.bf16 %v1015, %v1014
    %v1032 = vld [vmem:[#allocation10] sm:$0xff]
    %v1033 = vld [vmem:[#allocation10 + $0x8] sm:$0xff]
    %v1034 = vld [vmem:[#allocation10 + $0x10] sm:$0xff]
    %v1035 = vld [vmem:[#allocation10 + $0x18] sm:$0xff]
    %v1036 = vunpack.c.l.s8.bf16 %v1032
    %v1037 = vunpack.c.h.s8.bf16 %v1032
    %v1038 = vunpack.c.l.s8.bf16 %v1033
    %v1039 = vunpack.c.h.s8.bf16 %v1033
    %v1040 = vunpack.c.l.s8.bf16 %v1034
    %v1041 = vunpack.c.h.s8.bf16 %v1034
    %v1042 = vunpack.c.l.s8.bf16 %v1035
    %v1043 = vunpack.c.h.s8.bf16 %v1035
    %v1044 = vld [vmem:[#allocation11] sm:$0xff]
    %v1045 = vld [vmem:[#allocation11 + $0x8] sm:$0xff]
    %v1046 = vld [vmem:[#allocation11 + $0x10] sm:$0xff]
    %v1047 = vld [vmem:[#allocation11 + $0x18] sm:$0xff]
    %v1048 = vld [vmem:[#allocation11 + $0x20] sm:$0xff]
    %v1049 = vld [vmem:[#allocation11 + $0x28] sm:$0xff]
    %v1050 = vld [vmem:[#allocation11 + $0x30] sm:$0xff]
    %v1051 = vld [vmem:[#allocation11 + $0x38] sm:$0xff]
    %v1052 = vld [vmem:[#allocation11 + $0x40] sm:$0xff]
    %v1053 = vld [vmem:[#allocation11 + $0x48] sm:$0xff]
    %v1054 = vld [vmem:[#allocation11 + $0x50] sm:$0xff]
    %v1055 = vld [vmem:[#allocation11 + $0x58] sm:$0xff]
    %v1056 = vld [vmem:[#allocation11 + $0x60] sm:$0xff]
    %v1057 = vld [vmem:[#allocation11 + $0x68] sm:$0xff]
    %v1058 = vld [vmem:[#allocation11 + $0x70] sm:$0xff]
    %v1059 = vld [vmem:[#allocation11 + $0x78] sm:$0xff]
    %v1060 = vld [vmem:[#allocation11 + $0x80] sm:$0xff]
    %v1061 = vld [vmem:[#allocation11 + $0x88] sm:$0xff]
    %v1062 = vld [vmem:[#allocation11 + $0x90] sm:$0xff]
    %v1063 = vld [vmem:[#allocation11 + $0x98] sm:$0xff]
    %v1064 = vld [vmem:[#allocation11 + $0xa0] sm:$0xff]
    %v1065 = vld [vmem:[#allocation11 + $0xa8] sm:$0xff]
    %v1066 = vld [vmem:[#allocation11 + $0xb0] sm:$0xff]
    %v1067 = vld [vmem:[#allocation11 + $0xb8] sm:$0xff]
    %v1068 = vld [vmem:[#allocation11 + $0xc0] sm:$0xff]
    %v1069 = vld [vmem:[#allocation11 + $0xc8] sm:$0xff]
    %v1070 = vld [vmem:[#allocation11 + $0xd0] sm:$0xff]
    %v1071 = vld [vmem:[#allocation11 + $0xd8] sm:$0xff]
    %v1072 = vld [vmem:[#allocation11 + $0xe0] sm:$0xff]
    %v1073 = vld [vmem:[#allocation11 + $0xe8] sm:$0xff]
    %v1074 = vld [vmem:[#allocation11 + $0xf0] sm:$0xff]
    %v1075 = vld [vmem:[#allocation11 + $0xf8] sm:$0xff]
    %1076 = vxpose.xlu0.c.b16.start [1/8] %v1036, 128
    %1077 = vxpose.xlu0.c.b16.cont [2/8] %v1037, 128
    %1078 = vxpose.xlu0.c.b16.cont [3/8] %v1038, 128
    %1079 = vxpose.xlu0.c.b16.cont [4/8] %v1039, 128
    %1080 = vxpose.xlu0.c.b16.cont [5/8] %v1040, 128
    %1081 = vxpose.xlu0.c.b16.cont [6/8] %v1041, 128
    %1082 = vxpose.xlu0.c.b16.cont [7/8] %v1042, 128
    %1083 = vxpose.xlu0.c.b16.end [8/8] %v1043, 128
    %v1084 = vpop.trf.xlu0
    %v1085 = vpop.trf.xlu0
    %v1086 = vpop.trf.xlu0
    %v1087 = vpop.trf.xlu0
    %v1088 = vpop.trf.xlu0
    %v1089 = vpop.trf.xlu0
    %v1090 = vpop.trf.xlu0
    %v1091 = vpop.trf.xlu0
    %1092 = vmatprep.subr.bf16.mxu0 %v1031
    %1093 = vmatpush1.bf16.msra.mxu0 %v1030
    %1094 = vmatprep.subr.bf16.mxu0 %v1029
    %1095 = vmatpush1.bf16.msra.mxu0 %v1028
    %1096 = vmatprep.subr.bf16.mxu0 %v1027
    %1097 = vmatpush1.bf16.msra.mxu0 %v1026
    %1098 = vmatprep.subr.bf16.mxu0 %v1025
    %1099 = vmatpush1.bf16.msra.mxu0 %v1024
    %1100 = vmatprep.subr.bf16.mxu0 %v1023
    %1101 = vmatpush1.bf16.msra.mxu0 %v1022
    %1102 = vmatprep.subr.bf16.mxu0 %v1021
    %1103 = vmatpush1.bf16.msra.mxu0 %v1020
    %1104 = vmatprep.subr.bf16.mxu0 %v1019
    %1105 = vmatpush1.bf16.msra.mxu0 %v1018
    %1106 = vmatprep.subr.bf16.mxu0 %v1017
    %1107 = vmatpush1.bf16.msra.mxu0 %v1016
    %1108 = vmatprep.subr.bf16.mxu0 0
    %1109 = vmatpush2.bf16.msra.mxu0 0
    %1110 = vmatprep.subr.bf16.mxu0 0
    %1111 = vmatpush2.bf16.msra.mxu0 0
    %1112 = vmatprep.subr.bf16.mxu0 0
    %1113 = vmatpush2.bf16.msra.mxu0 0
    %1114 = vmatprep.subr.bf16.mxu0 0
    %1115 = vmatpush2.bf16.msra.mxu0 0
    %1116 = vmatprep.subr.bf16.mxu0 0
    %1117 = vmatpush2.bf16.msra.mxu0 0
    %1118 = vmatprep.subr.bf16.mxu0 0
    %1119 = vmatpush2.bf16.msra.mxu0 0
    %1120 = vmatprep.subr.bf16.mxu0 0
    %1121 = vmatpush2.bf16.msra.mxu0 0
    %1122 = vmatprep.subr.bf16.mxu0 0
    %1123 = vmatpush2.bf16.msra.mxu0 0
    %1124 = vmatprep.mubr.bf16.mxu0 0
    %1125 = vmatmul.mubr.bf16.gmra.mxu0 %v1084
    %v1126 = vpop.f32.mrf.mxu0
    %v1127 = vadd.f32 0.0, %v1126
    %v1128 = vpop.f32.mrf.mxu0
    %v1129 = vadd.f32 0.0, %v1128
    %v1130 = vpop.f32.mrf.mxu0
    %v1131 = vadd.f32 0.0, %v1130
    %v1132 = vpop.f32.mrf.mxu0
    %v1133 = vadd.f32 0.0, %v1132
    %1134 = vmatprep.mubr.bf16.mxu0 0
    %1135 = vmatmul.mubr.bf16.gmra.mxu0 %v1085
    %v1136 = vpop.f32.mrf.mxu0
    %v1137 = vadd.f32 0.0, %v1136
    %v1138 = vpop.f32.mrf.mxu0
    %v1139 = vadd.f32 0.0, %v1138
    %v1140 = vpop.f32.mrf.mxu0
    %v1141 = vadd.f32 0.0, %v1140
    %v1142 = vpop.f32.mrf.mxu0
    %v1143 = vadd.f32 0.0, %v1142
    %1144 = vmatprep.mubr.bf16.mxu0 0
    %1145 = vmatmul.mubr.bf16.gmra.mxu0 %v1086
    %v1146 = vpop.f32.mrf.mxu0
    %v1147 = vadd.f32 0.0, %v1146
    %v1148 = vpop.f32.mrf.mxu0
    %v1149 = vadd.f32 0.0, %v1148
    %v1150 = vpop.f32.mrf.mxu0
    %v1151 = vadd.f32 0.0, %v1150
    %v1152 = vpop.f32.mrf.mxu0
    %v1153 = vadd.f32 0.0, %v1152
    %1154 = vmatprep.mubr.bf16.mxu0 0
    %1155 = vmatmul.mubr.bf16.gmra.mxu0 %v1087
    %v1156 = vpop.f32.mrf.mxu0
    %v1157 = vadd.f32 0.0, %v1156
    %v1158 = vpop.f32.mrf.mxu0
    %v1159 = vadd.f32 0.0, %v1158
    %v1160 = vpop.f32.mrf.mxu0
    %v1161 = vadd.f32 0.0, %v1160
    %v1162 = vpop.f32.mrf.mxu0
    %v1163 = vadd.f32 0.0, %v1162
    %1164 = vmatprep.mubr.bf16.mxu0 0
    %1165 = vmatmul.mubr.bf16.gmra.mxu0 %v1088
    %v1166 = vpop.f32.mrf.mxu0
    %v1167 = vadd.f32 0.0, %v1166
    %v1168 = vpop.f32.mrf.mxu0
    %v1169 = vadd.f32 0.0, %v1168
    %v1170 = vpop.f32.mrf.mxu0
    %v1171 = vadd.f32 0.0, %v1170
    %v1172 = vpop.f32.mrf.mxu0
    %v1173 = vadd.f32 0.0, %v1172
    %1174 = vmatprep.mubr.bf16.mxu0 0
    %1175 = vmatmul.mubr.bf16.gmra.mxu0 %v1089
    %v1176 = vpop.f32.mrf.mxu0
    %v1177 = vadd.f32 0.0, %v1176
    %v1178 = vpop.f32.mrf.mxu0
    %v1179 = vadd.f32 0.0, %v1178
    %v1180 = vpop.f32.mrf.mxu0
    %v1181 = vadd.f32 0.0, %v1180
    %v1182 = vpop.f32.mrf.mxu0
    %v1183 = vadd.f32 0.0, %v1182
    %1184 = vmatprep.mubr.bf16.mxu0 0
    %1185 = vmatmul.mubr.bf16.gmra.mxu0 %v1090
    %v1186 = vpop.f32.mrf.mxu0
    %v1187 = vadd.f32 0.0, %v1186
    %v1188 = vpop.f32.mrf.mxu0
    %v1189 = vadd.f32 0.0, %v1188
    %v1190 = vpop.f32.mrf.mxu0
    %v1191 = vadd.f32 0.0, %v1190
    %v1192 = vpop.f32.mrf.mxu0
    %v1193 = vadd.f32 0.0, %v1192
    %1194 = vmatprep.mubr.bf16.mxu0 0
    %1195 = vmatmul.mubr.bf16.gmra.mxu0 %v1091
    %v1196 = vpop.f32.mrf.mxu0
    %v1197 = vadd.f32 0.0, %v1196
    %v1198 = vpop.f32.mrf.mxu0
    %v1199 = vadd.f32 0.0, %v1198
    %v1200 = vpop.f32.mrf.mxu0
    %v1201 = vadd.f32 0.0, %v1200
    %v1202 = vpop.f32.mrf.mxu0
    %v1203 = vadd.f32 0.0, %v1202
    %1204 = vdwg.mxu0
    %v1205 = vadd.f32 %v1044, %v1127
    %v1206 = vadd.f32 %v1045, %v1129
    %v1207 = vadd.f32 %v1046, %v1131
    %v1208 = vadd.f32 %v1047, %v1133
    %v1209 = vadd.f32 %v1048, %v1137
    %v1210 = vadd.f32 %v1049, %v1139
    %v1211 = vadd.f32 %v1050, %v1141
    %v1212 = vadd.f32 %v1051, %v1143
    %v1213 = vadd.f32 %v1052, %v1147
    %v1214 = vadd.f32 %v1053, %v1149
    %v1215 = vadd.f32 %v1054, %v1151
    %v1216 = vadd.f32 %v1055, %v1153
    %v1217 = vadd.f32 %v1056, %v1157
    %v1218 = vadd.f32 %v1057, %v1159
    %v1219 = vadd.f32 %v1058, %v1161
    %v1220 = vadd.f32 %v1059, %v1163
    %v1221 = vadd.f32 %v1060, %v1167
    %v1222 = vadd.f32 %v1061, %v1169
    %v1223 = vadd.f32 %v1062, %v1171
    %v1224 = vadd.f32 %v1063, %v1173
    %v1225 = vadd.f32 %v1064, %v1177
    %v1226 = vadd.f32 %v1065, %v1179
    %v1227 = vadd.f32 %v1066, %v1181
    %v1228 = vadd.f32 %v1067, %v1183
    %v1229 = vadd.f32 %v1068, %v1187
    %v1230 = vadd.f32 %v1069, %v1189
    %v1231 = vadd.f32 %v1070, %v1191
    %v1232 = vadd.f32 %v1071, %v1193
    %v1233 = vadd.f32 %v1072, %v1197
    %v1234 = vadd.f32 %v1073, %v1199
    %v1235 = vadd.f32 %v1074, %v1201
    %v1236 = vadd.f32 %v1075, %v1203
    %1237 = vst [vmem:[#allocation11] sm:$0xff] %v1205
    %1238 = vst [vmem:[#allocation11 + $0x8] sm:$0xff] %v1206
    %1239 = vst [vmem:[#allocation11 + $0x10] sm:$0xff] %v1207
    %1240 = vst [vmem:[#allocation11 + $0x18] sm:$0xff] %v1208
    %1241 = vst [vmem:[#allocation11 + $0x20] sm:$0xff] %v1209
    %1242 = vst [vmem:[#allocation11 + $0x28] sm:$0xff] %v1210
    %1243 = vst [vmem:[#allocation11 + $0x30] sm:$0xff] %v1211
    %1244 = vst [vmem:[#allocation11 + $0x38] sm:$0xff] %v1212
    %1245 = vst [vmem:[#allocation11 + $0x40] sm:$0xff] %v1213
    %1246 = vst [vmem:[#allocation11 + $0x48] sm:$0xff] %v1214
    %1247 = vst [vmem:[#allocation11 + $0x50] sm:$0xff] %v1215
    %1248 = vst [vmem:[#allocation11 + $0x58] sm:$0xff] %v1216
    %1249 = vst [vmem:[#allocation11 + $0x60] sm:$0xff] %v1217
    %1250 = vst [vmem:[#allocation11 + $0x68] sm:$0xff] %v1218
    %1251 = vst [vmem:[#allocation11 + $0x70] sm:$0xff] %v1219
    %1252 = vst [vmem:[#allocation11 + $0x78] sm:$0xff] %v1220
    %1253 = vst [vmem:[#allocation11 + $0x80] sm:$0xff] %v1221
    %1254 = vst [vmem:[#allocation11 + $0x88] sm:$0xff] %v1222
    %1255 = vst [vmem:[#allocation11 + $0x90] sm:$0xff] %v1223
    %1256 = vst [vmem:[#allocation11 + $0x98] sm:$0xff] %v1224
    %1257 = vst [vmem:[#allocation11 + $0xa0] sm:$0xff] %v1225
    %1258 = vst [vmem:[#allocation11 + $0xa8] sm:$0xff] %v1226
    %1259 = vst [vmem:[#allocation11 + $0xb0] sm:$0xff] %v1227
    %1260 = vst [vmem:[#allocation11 + $0xb8] sm:$0xff] %v1228
    %1261 = vst [vmem:[#allocation11 + $0xc0] sm:$0xff] %v1229
    %1262 = vst [vmem:[#allocation11 + $0xc8] sm:$0xff] %v1230
    %1263 = vst [vmem:[#allocation11 + $0xd0] sm:$0xff] %v1231
    %1264 = vst [vmem:[#allocation11 + $0xd8] sm:$0xff] %v1232
    %1265 = vst [vmem:[#allocation11 + $0xe0] sm:$0xff] %v1233
    %1266 = vst [vmem:[#allocation11 + $0xe8] sm:$0xff] %v1234
    %1267 = vst [vmem:[#allocation11 + $0xf0] sm:$0xff] %v1235
    %1268 = vst [vmem:[#allocation11 + $0xf8] sm:$0xff] %v1236
    // Predicated region
    $region46: #{tpu_custom_call.1} parent=1 // pred_check
      %p1269 = pneg %p90
    $region47: #{tpu_custom_call.1} parent=1 // pred_check_branch
      %1271 = sbr.rel (%p1269) target = $region49
    $region48: #{tpu_custom_call.1} parent=1 // pred_region
      %v1272 = vld [vmem:[#allocation11] sm:$0xff]
      %v1273 = vld [vmem:[#allocation11 + $0x8] sm:$0xff]
      %v1274 = vld [vmem:[#allocation11 + $0x10] sm:$0xff]
      %v1275 = vld [vmem:[#allocation11 + $0x18] sm:$0xff]
      %v1276 = vld [vmem:[#allocation11 + $0x20] sm:$0xff]
      %v1277 = vld [vmem:[#allocation11 + $0x28] sm:$0xff]
      %v1278 = vld [vmem:[#allocation11 + $0x30] sm:$0xff]
      %v1279 = vld [vmem:[#allocation11 + $0x38] sm:$0xff]
      %v1280 = vld [vmem:[#allocation11 + $0x40] sm:$0xff]
      %v1281 = vld [vmem:[#allocation11 + $0x48] sm:$0xff]
      %v1282 = vld [vmem:[#allocation11 + $0x50] sm:$0xff]
      %v1283 = vld [vmem:[#allocation11 + $0x58] sm:$0xff]
      %v1284 = vld [vmem:[#allocation11 + $0x60] sm:$0xff]
      %v1285 = vld [vmem:[#allocation11 + $0x68] sm:$0xff]
      %v1286 = vld [vmem:[#allocation11 + $0x70] sm:$0xff]
      %v1287 = vld [vmem:[#allocation11 + $0x78] sm:$0xff]
      %v1288 = vld [vmem:[#allocation11 + $0x80] sm:$0xff]
      %v1289 = vld [vmem:[#allocation11 + $0x88] sm:$0xff]
      %v1290 = vld [vmem:[#allocation11 + $0x90] sm:$0xff]
      %v1291 = vld [vmem:[#allocation11 + $0x98] sm:$0xff]
      %v1292 = vld [vmem:[#allocation11 + $0xa0] sm:$0xff]
      %v1293 = vld [vmem:[#allocation11 + $0xa8] sm:$0xff]
      %v1294 = vld [vmem:[#allocation11 + $0xb0] sm:$0xff]
      %v1295 = vld [vmem:[#allocation11 + $0xb8] sm:$0xff]
      %v1296 = vld [vmem:[#allocation11 + $0xc0] sm:$0xff]
      %v1297 = vld [vmem:[#allocation11 + $0xc8] sm:$0xff]
      %v1298 = vld [vmem:[#allocation11 + $0xd0] sm:$0xff]
      %v1299 = vld [vmem:[#allocation11 + $0xd8] sm:$0xff]
      %v1300 = vld [vmem:[#allocation11 + $0xe0] sm:$0xff]
      %v1301 = vld [vmem:[#allocation11 + $0xe8] sm:$0xff]
      %v1302 = vld [vmem:[#allocation11 + $0xf0] sm:$0xff]
      %v1303 = vld [vmem:[#allocation11 + $0xf8] sm:$0xff]
      %vm1304 = vcmp.gt.f32.partialorder %v1272, 0.0
      %vm1305 = vcmp.gt.f32.partialorder %v1274, 0.0
      %vm1306 = vcmp.gt.f32.partialorder %v1276, 0.0
      %vm1307 = vcmp.gt.f32.partialorder %v1278, 0.0
      %vm1308 = vcmp.gt.f32.partialorder %v1280, 0.0
      %vm1309 = vcmp.gt.f32.partialorder %v1282, 0.0
      %vm1310 = vcmp.gt.f32.partialorder %v1284, 0.0
      %vm1311 = vcmp.gt.f32.partialorder %v1286, 0.0
      %vm1312 = vcmp.gt.f32.partialorder %v1288, 0.0
      %vm1313 = vcmp.gt.f32.partialorder %v1290, 0.0
      %vm1314 = vcmp.gt.f32.partialorder %v1292, 0.0
      %vm1315 = vcmp.gt.f32.partialorder %v1294, 0.0
      %vm1316 = vcmp.gt.f32.partialorder %v1296, 0.0
      %vm1317 = vcmp.gt.f32.partialorder %v1298, 0.0
      %vm1318 = vcmp.gt.f32.partialorder %v1300, 0.0
      %vm1319 = vcmp.gt.f32.partialorder %v1302, 0.0
      %v1320 = vsel %vm1304, %v1272, 1.0
      %v1321 = vsel %vm1305, %v1274, 1.0
      %v1322 = vsel %vm1306, %v1276, 1.0
      %v1323 = vsel %vm1307, %v1278, 1.0
      %v1324 = vsel %vm1308, %v1280, 1.0
      %v1325 = vsel %vm1309, %v1282, 1.0
      %v1326 = vsel %vm1310, %v1284, 1.0
      %v1327 = vsel %vm1311, %v1286, 1.0
      %v1328 = vsel %vm1312, %v1288, 1.0
      %v1329 = vsel %vm1313, %v1290, 1.0
      %v1330 = vsel %vm1314, %v1292, 1.0
      %v1331 = vsel %vm1315, %v1294, 1.0
      %v1332 = vsel %vm1316, %v1296, 1.0
      %v1333 = vsel %vm1317, %v1298, 1.0
      %v1334 = vsel %vm1318, %v1300, 1.0
      %v1335 = vsel %vm1319, %v1302, 1.0
      %1337 = vset.pattern.permute.xlu0 33
      %1338 = vperm.xlu0 %1337, %v1320
      %v1339 = vpop.permute.xlu0 %1338
      %1342 = vset.pattern.permute.xlu0 33
      %1343 = vperm.xlu0 %1342, %v1321
      %v1344 = vpop.permute.xlu0 %1343
      %1347 = vset.pattern.permute.xlu0 33
      %1348 = vperm.xlu0 %1347, %v1322
      %v1349 = vpop.permute.xlu0 %1348
      %1352 = vset.pattern.permute.xlu0 33
      %1353 = vperm.xlu0 %1352, %v1323
      %v1354 = vpop.permute.xlu0 %1353
      %1357 = vset.pattern.permute.xlu0 33
      %1358 = vperm.xlu0 %1357, %v1324
      %v1359 = vpop.permute.xlu0 %1358
      %1362 = vset.pattern.permute.xlu0 33
      %1363 = vperm.xlu0 %1362, %v1325
      %v1364 = vpop.permute.xlu0 %1363
      %1367 = vset.pattern.permute.xlu0 33
      %1368 = vperm.xlu0 %1367, %v1326
      %v1369 = vpop.permute.xlu0 %1368
      %1372 = vset.pattern.permute.xlu0 33
      %1373 = vperm.xlu0 %1372, %v1327
      %v1374 = vpop.permute.xlu0 %1373
      %1377 = vset.pattern.permute.xlu0 33
      %1378 = vperm.xlu0 %1377, %v1328
      %v1379 = vpop.permute.xlu0 %1378
      %1382 = vset.pattern.permute.xlu0 33
      %1383 = vperm.xlu0 %1382, %v1329
      %v1384 = vpop.permute.xlu0 %1383
      %1387 = vset.pattern.permute.xlu0 33
      %1388 = vperm.xlu0 %1387, %v1330
      %v1389 = vpop.permute.xlu0 %1388
      %1392 = vset.pattern.permute.xlu0 33
      %1393 = vperm.xlu0 %1392, %v1331
      %v1394 = vpop.permute.xlu0 %1393
      %1397 = vset.pattern.permute.xlu0 33
      %1398 = vperm.xlu0 %1397, %v1332
      %v1399 = vpop.permute.xlu0 %1398
      %1402 = vset.pattern.permute.xlu0 33
      %1403 = vperm.xlu0 %1402, %v1333
      %v1404 = vpop.permute.xlu0 %1403
      %1407 = vset.pattern.permute.xlu0 33
      %1408 = vperm.xlu0 %1407, %v1334
      %v1409 = vpop.permute.xlu0 %1408
      %1412 = vset.pattern.permute.xlu0 33
      %1413 = vperm.xlu0 %1412, %v1335
      %v1414 = vpop.permute.xlu0 %1413
      %v1416 = vrcp.pop %v1339
      %v1417 = vmul.f32 %v1272, %v1416
      %v1418 = vrcp.pop %v1344
      %v1419 = vmul.f32 %v1274, %v1418
      %v1420 = vrcp.pop %v1349
      %v1421 = vmul.f32 %v1276, %v1420
      %v1422 = vrcp.pop %v1354
      %v1423 = vmul.f32 %v1278, %v1422
      %v1424 = vrcp.pop %v1359
      %v1425 = vmul.f32 %v1280, %v1424
      %v1426 = vrcp.pop %v1364
      %v1427 = vmul.f32 %v1282, %v1426
      %v1428 = vrcp.pop %v1369
      %v1429 = vmul.f32 %v1284, %v1428
      %v1430 = vrcp.pop %v1374
      %v1431 = vmul.f32 %v1286, %v1430
      %v1432 = vrcp.pop %v1379
      %v1433 = vmul.f32 %v1288, %v1432
      %v1434 = vrcp.pop %v1384
      %v1435 = vmul.f32 %v1290, %v1434
      %v1436 = vrcp.pop %v1389
      %v1437 = vmul.f32 %v1292, %v1436
      %v1438 = vrcp.pop %v1394
      %v1439 = vmul.f32 %v1294, %v1438
      %v1440 = vrcp.pop %v1399
      %v1441 = vmul.f32 %v1296, %v1440
      %v1442 = vrcp.pop %v1404
      %v1443 = vmul.f32 %v1298, %v1442
      %v1444 = vrcp.pop %v1409
      %v1445 = vmul.f32 %v1300, %v1444
      %v1446 = vrcp.pop %v1414
      %v1447 = vmul.f32 %v1302, %v1446
      %vm1448 = vcmp.gt.f32.partialorder %v1273, 0.0
      %vm1449 = vcmp.gt.f32.partialorder %v1275, 0.0
      %vm1450 = vcmp.gt.f32.partialorder %v1277, 0.0
      %vm1451 = vcmp.gt.f32.partialorder %v1279, 0.0
      %vm1452 = vcmp.gt.f32.partialorder %v1281, 0.0
      %vm1453 = vcmp.gt.f32.partialorder %v1283, 0.0
      %vm1454 = vcmp.gt.f32.partialorder %v1285, 0.0
      %vm1455 = vcmp.gt.f32.partialorder %v1287, 0.0
      %vm1456 = vcmp.gt.f32.partialorder %v1289, 0.0
      %vm1457 = vcmp.gt.f32.partialorder %v1291, 0.0
      %vm1458 = vcmp.gt.f32.partialorder %v1293, 0.0
      %vm1459 = vcmp.gt.f32.partialorder %v1295, 0.0
      %vm1460 = vcmp.gt.f32.partialorder %v1297, 0.0
      %vm1461 = vcmp.gt.f32.partialorder %v1299, 0.0
      %vm1462 = vcmp.gt.f32.partialorder %v1301, 0.0
      %vm1463 = vcmp.gt.f32.partialorder %v1303, 0.0
      %v1464 = vsel %vm1448, %v1273, 1.0
      %v1465 = vsel %vm1449, %v1275, 1.0
      %v1466 = vsel %vm1450, %v1277, 1.0
      %v1467 = vsel %vm1451, %v1279, 1.0
      %v1468 = vsel %vm1452, %v1281, 1.0
      %v1469 = vsel %vm1453, %v1283, 1.0
      %v1470 = vsel %vm1454, %v1285, 1.0
      %v1471 = vsel %vm1455, %v1287, 1.0
      %v1472 = vsel %vm1456, %v1289, 1.0
      %v1473 = vsel %vm1457, %v1291, 1.0
      %v1474 = vsel %vm1458, %v1293, 1.0
      %v1475 = vsel %vm1459, %v1295, 1.0
      %v1476 = vsel %vm1460, %v1297, 1.0
      %v1477 = vsel %vm1461, %v1299, 1.0
      %v1478 = vsel %vm1462, %v1301, 1.0
      %v1479 = vsel %vm1463, %v1303, 1.0
      %1481 = vset.pattern.permute.xlu0 33
      %1482 = vperm.xlu0 %1481, %v1464
      %v1483 = vpop.permute.xlu0 %1482
      %1486 = vset.pattern.permute.xlu0 33
      %1487 = vperm.xlu0 %1486, %v1465
      %v1488 = vpop.permute.xlu0 %1487
      %1491 = vset.pattern.permute.xlu0 33
      %1492 = vperm.xlu0 %1491, %v1466
      %v1493 = vpop.permute.xlu0 %1492
      %1496 = vset.pattern.permute.xlu0 33
      %1497 = vperm.xlu0 %1496, %v1467
      %v1498 = vpop.permute.xlu0 %1497
      %1501 = vset.pattern.permute.xlu0 33
      %1502 = vperm.xlu0 %1501, %v1468
      %v1503 = vpop.permute.xlu0 %1502
      %1506 = vset.pattern.permute.xlu0 33
      %1507 = vperm.xlu0 %1506, %v1469
      %v1508 = vpop.permute.xlu0 %1507
      %1511 = vset.pattern.permute.xlu0 33
      %1512 = vperm.xlu0 %1511, %v1470
      %v1513 = vpop.permute.xlu0 %1512
      %1516 = vset.pattern.permute.xlu0 33
      %1517 = vperm.xlu0 %1516, %v1471
      %v1518 = vpop.permute.xlu0 %1517
      %1521 = vset.pattern.permute.xlu0 33
      %1522 = vperm.xlu0 %1521, %v1472
      %v1523 = vpop.permute.xlu0 %1522
      %1526 = vset.pattern.permute.xlu0 33
      %1527 = vperm.xlu0 %1526, %v1473
      %v1528 = vpop.permute.xlu0 %1527
      %1531 = vset.pattern.permute.xlu0 33
      %1532 = vperm.xlu0 %1531, %v1474
      %v1533 = vpop.permute.xlu0 %1532
      %1536 = vset.pattern.permute.xlu0 33
      %1537 = vperm.xlu0 %1536, %v1475
      %v1538 = vpop.permute.xlu0 %1537
      %1541 = vset.pattern.permute.xlu0 33
      %1542 = vperm.xlu0 %1541, %v1476
      %v1543 = vpop.permute.xlu0 %1542
      %1546 = vset.pattern.permute.xlu0 33
      %1547 = vperm.xlu0 %1546, %v1477
      %v1548 = vpop.permute.xlu0 %1547
      %1551 = vset.pattern.permute.xlu0 33
      %1552 = vperm.xlu0 %1551, %v1478
      %v1553 = vpop.permute.xlu0 %1552
      %1556 = vset.pattern.permute.xlu0 33
      %1557 = vperm.xlu0 %1556, %v1479
      %v1558 = vpop.permute.xlu0 %1557
      %v1560 = vrcp.pop %v1483
      %v1561 = vmul.f32 %v1273, %v1560
      %v1562 = vrcp.pop %v1488
      %v1563 = vmul.f32 %v1275, %v1562
      %v1564 = vrcp.pop %v1493
      %v1565 = vmul.f32 %v1277, %v1564
      %v1566 = vrcp.pop %v1498
      %v1567 = vmul.f32 %v1279, %v1566
      %v1568 = vrcp.pop %v1503
      %v1569 = vmul.f32 %v1281, %v1568
      %v1570 = vrcp.pop %v1508
      %v1571 = vmul.f32 %v1283, %v1570
      %v1572 = vrcp.pop %v1513
      %v1573 = vmul.f32 %v1285, %v1572
      %v1574 = vrcp.pop %v1518
      %v1575 = vmul.f32 %v1287, %v1574
      %v1576 = vrcp.pop %v1523
      %v1577 = vmul.f32 %v1289, %v1576
      %v1578 = vrcp.pop %v1528
      %v1579 = vmul.f32 %v1291, %v1578
      %v1580 = vrcp.pop %v1533
      %v1581 = vmul.f32 %v1293, %v1580
      %v1582 = vrcp.pop %v1538
      %v1583 = vmul.f32 %v1295, %v1582
      %v1584 = vrcp.pop %v1543
      %v1585 = vmul.f32 %v1297, %v1584
      %v1586 = vrcp.pop %v1548
      %v1587 = vmul.f32 %v1299, %v1586
      %v1588 = vrcp.pop %v1553
      %v1589 = vmul.f32 %v1301, %v1588
      %v1590 = vrcp.pop %v1558
      %v1591 = vmul.f32 %v1303, %v1590
      %1592 = vst [vmem:[#allocation11] sm:$0xff] %v1417
      %1593 = vst [vmem:[#allocation11 + $0x8] sm:$0xff] %v1561
      %1594 = vst [vmem:[#allocation11 + $0x10] sm:$0xff] %v1419
      %1595 = vst [vmem:[#allocation11 + $0x18] sm:$0xff] %v1563
      %1596 = vst [vmem:[#allocation11 + $0x20] sm:$0xff] %v1421
      %1597 = vst [vmem:[#allocation11 + $0x28] sm:$0xff] %v1565
      %1598 = vst [vmem:[#allocation11 + $0x30] sm:$0xff] %v1423
      %1599 = vst [vmem:[#allocation11 + $0x38] sm:$0xff] %v1567
      %1600 = vst [vmem:[#allocation11 + $0x40] sm:$0xff] %v1425
      %1601 = vst [vmem:[#allocation11 + $0x48] sm:$0xff] %v1569
      %1602 = vst [vmem:[#allocation11 + $0x50] sm:$0xff] %v1427
      %1603 = vst [vmem:[#allocation11 + $0x58] sm:$0xff] %v1571
      %1604 = vst [vmem:[#allocation11 + $0x60] sm:$0xff] %v1429
      %1605 = vst [vmem:[#allocation11 + $0x68] sm:$0xff] %v1573
      %1606 = vst [vmem:[#allocation11 + $0x70] sm:$0xff] %v1431
      %1607 = vst [vmem:[#allocation11 + $0x78] sm:$0xff] %v1575
      %1608 = vst [vmem:[#allocation11 + $0x80] sm:$0xff] %v1433
      %1609 = vst [vmem:[#allocation11 + $0x88] sm:$0xff] %v1577
      %1610 = vst [vmem:[#allocation11 + $0x90] sm:$0xff] %v1435
      %1611 = vst [vmem:[#allocation11 + $0x98] sm:$0xff] %v1579
      %1612 = vst [vmem:[#allocation11 + $0xa0] sm:$0xff] %v1437
      %1613 = vst [vmem:[#allocation11 + $0xa8] sm:$0xff] %v1581
      %1614 = vst [vmem:[#allocation11 + $0xb0] sm:$0xff] %v1439
      %1615 = vst [vmem:[#allocation11 + $0xb8] sm:$0xff] %v1583
      %1616 = vst [vmem:[#allocation11 + $0xc0] sm:$0xff] %v1441
      %1617 = vst [vmem:[#allocation11 + $0xc8] sm:$0xff] %v1585
      %1618 = vst [vmem:[#allocation11 + $0xd0] sm:$0xff] %v1443
      %1619 = vst [vmem:[#allocation11 + $0xd8] sm:$0xff] %v1587
      %1620 = vst [vmem:[#allocation11 + $0xe0] sm:$0xff] %v1445
      %1621 = vst [vmem:[#allocation11 + $0xe8] sm:$0xff] %v1589
      %1622 = vst [vmem:[#allocation11 + $0xf0] sm:$0xff] %v1447
      %1623 = vst [vmem:[#allocation11 + $0xf8] sm:$0xff] %v1591
    $region49: #{tpu_custom_call.1} parent=1 // pred_fallthru
      _
    // Predicated region
    $region50: #{tpu_custom_call.1} parent=1 // pred_check
      _
    $region51: #{tpu_custom_call.1} parent=1 // pred_check_branch
      %1625 = sbr.rel (0) target = $region53
    $region52: #{tpu_custom_call.1} parent=1 // pred_region
      %s1627 = ssub.s32 4096, 4096
      %1628 = vsyncadd [#allocation4], %s1627
      %s1629 = sshll.u32 [#allocation11], 4
      %s1630 = int_to_ptr.vmem [resolvable:$true] %s1629
      %1635 = dma.vmem_to_hbm [thread:$0]  %s1630, 4096, %s5, [#allocation4], 256, 256, 16
    $region53: #{tpu_custom_call.1} parent=1 // pred_fallthru
      _
    // Predicated region
    $region54: #{tpu_custom_call.1} parent=1 // pred_check
      _
    $region55: #{tpu_custom_call.1} parent=1 // pred_check_branch
      %1637 = sbr.rel (0) target = $region57
    $region56: #{tpu_custom_call.1} parent=1 // pred_region
      %1638 = dma.done [#allocation4], 4096
    $region57: #{tpu_custom_call.1} parent=1 // pred_fallthru
      _
    %1639 = vsyncpa [#allocation3], 1
    %1640 = vsyncpa [#allocation6], 1
    %1641 = vsyncpa [#allocation9], 1
    %1642 = vsyncpa [#allocation4], 1

</llo_original>
